<compile_context>
chip_gen: v5e
topology: v5e:2x2
jax: 0.10.0
libtpu: 0.0.40
codegen_flags: <defaults>
</compile_context>

<pallas_src>
import jax
import jax.numpy as jnp
from jax.experimental import pallas as pl
from jax.experimental.pallas import tpu as pltpu

IN_FEATURES = 28 * 28   # 784 — used directly as a full-dim block (no K padding needed)
HIDDEN = 512
OUT_FEATURES = 10
N_PAD = 128             # lane-dense padded classifier width
TB_CAP = 1024           # batch-tile cap (review: 512-1024)


def _round_up(x, m):
    return (x + m - 1) // m * m


def mlp_kernel(x_ref, w1_ref, b1_ref, w2_ref, b2_ref, w3_ref, b3_ref, out_ref):
    # x arrives f32 straight from HBM; cast to bf16 in-kernel (avoids a separate
    # wrapper-side pad/cast pass over the activations).
    x = x_ref[...].astype(jnp.bfloat16)
    # layer 1: (TB,784)bf16 @ (784,512)bf16 -> f32 acc; bias+ReLU in f32, then bf16.
    h1 = jnp.dot(x, w1_ref[...], preferred_element_type=jnp.float32)
    h1 = jnp.maximum(h1 + b1_ref[...], 0.0).astype(jnp.bfloat16)
    # layer 2: (TB,512) @ (512,512)
    h2 = jnp.dot(h1, w2_ref[...], preferred_element_type=jnp.float32)
    h2 = jnp.maximum(h2 + b2_ref[...], 0.0).astype(jnp.bfloat16)
    # layer 3: (TB,512) @ (512,128)  (classifier zero-padded to 128 lanes -> unmasked vst)
    logits = jnp.dot(h2, w3_ref[...], preferred_element_type=jnp.float32)
    out_ref[...] = (logits + b3_ref[...]).astype(out_ref.dtype)


def prepare_params(params, dtype=jnp.bfloat16):
    """Cast weights to bf16; zero-pad w3/b3 along N (10->128). Biases stay f32
    (bias-add / ReLU are done in f32 inside the kernel). w1 keeps its natural 784 K."""
    w1, b1, w2, b2, w3, b3 = params
    w1p = w1.astype(dtype)                                                   # (784, 512)
    w2p = w2.astype(dtype)                                                   # (512, 512)
    w3p = jnp.zeros((HIDDEN, N_PAD), dtype).at[:, :OUT_FEATURES].set(w3.astype(dtype))
    b1p = b1.reshape(1, HIDDEN).astype(jnp.float32)
    b2p = b2.reshape(1, HIDDEN).astype(jnp.float32)
    b3p = jnp.zeros((1, N_PAD), jnp.float32).at[:, :OUT_FEATURES].set(b3.astype(jnp.float32))
    return (w1p, b1p, w2p, b2p, w3p, b3p)


def _pick_batch_tile(B):
    if B <= 8:
        # Single tiny block; a block dim equal to the full array dim is always legal.
        return B
    # >= 2 grid steps so v7x shards the batch over both TensorCores; multiple of 8
    # sublanes; capped so total VMEM stays well under the scoped limit.
    return max(8, min(TB_CAP, _round_up(pl.cdiv(B, 2), 8)))


@jax.jit
def mlp_forward(x_nchw, prepared):
    """x_nchw: (B, 1, 28, 28) float32. Returns logits (B, 10) float32."""
    w1, b1, w2, b2, w3, b3 = prepared
    B = x_nchw.shape[0]
    # torch.nn.Flatten(start_dim=1): row-major reshape, no copy in XLA.
    x = x_nchw.reshape(B, IN_FEATURES)

    tb = _pick_batch_tile(B)
    grid = (pl.cdiv(B, tb),)     # ragged last tile: OOB rows read garbage but only feed
                                 # their own (nonexistent) output rows; writes are clipped.
    resident = lambda i: (0, 0)  # weights/biases: same block every step -> fetched once

    flops = 2 * B * (IN_FEATURES * HIDDEN + HIDDEN * HIDDEN + HIDDEN * N_PAD)
    bytes_accessed = (
        x.size * x.dtype.itemsize
        + sum(a.size * a.dtype.itemsize for a in (w1, b1, w2, b2, w3, b3))
        + B * N_PAD * 4
    )

    out = pl.pallas_call(
        mlp_kernel,
        out_shape=jax.ShapeDtypeStruct((B, N_PAD), jnp.float32),
        grid_spec=pltpu.PrefetchScalarGridSpec(
            num_scalar_prefetch=0,
            grid=grid,
            in_specs=[
                pl.BlockSpec((tb, IN_FEATURES), lambda i: (i, 0)),   # x tile (f32, full K)
                pl.BlockSpec((IN_FEATURES, HIDDEN), resident),       # w1
                pl.BlockSpec((1, HIDDEN), resident),                 # b1
                pl.BlockSpec((HIDDEN, HIDDEN), resident),            # w2
                pl.BlockSpec((1, HIDDEN), resident),                 # b2
                pl.BlockSpec((HIDDEN, N_PAD), resident),             # w3 (padded to 128)
                pl.BlockSpec((1, N_PAD), resident),                  # b3 (padded to 128)
            ],
            out_specs=pl.BlockSpec((tb, N_PAD), lambda i: (i, 0)),
        ),
        compiler_params=pltpu.CompilerParams(
            dimension_semantics=("parallel",),
            vmem_limit_bytes=40 * 1024 * 1024,
        ),
        cost_estimate=pl.CostEstimate(
            flops=flops, transcendentals=0, bytes_accessed=bytes_accessed),
    )(x, w1, b1, w2, b2, w3, b3)

    # Strip the lane padding of the classifier.
    return out[:, :OUT_FEATURES]


def init_params(key):
    """Deterministic init matching torch.nn.Linear (uniform(+-1/sqrt(fan_in))).
    Weights are stored (in, out) so the hot path is x @ W + b."""
    k1, k2, k3, k4, k5, k6 = jax.random.split(key, 6)

    def lin(kw, kb, fan_in, fan_out):
        bound = 1.0 / jnp.sqrt(fan_in)
        w = jax.random.uniform(kw, (fan_in, fan_out), jnp.float32, -bound, bound)
        b = jax.random.uniform(kb, (fan_out,), jnp.float32, -bound, bound)
        return w, b

    w1, b1 = lin(k1, k2, IN_FEATURES, HIDDEN)
    w2, b2 = lin(k3, k4, HIDDEN, HIDDEN)
    w3, b3 = lin(k5, k6, HIDDEN, OUT_FEATURES)
    return (w1, b1, w2, b2, w3, b3)


if __name__ == "__main__":
    key = jax.random.PRNGKey(0)
    kx, kp = jax.random.split(key)
    B = 8
    x = jax.random.normal(kx, (B, 1, 28, 28), jnp.float32)
    params = init_params(kp)
    prepared = prepare_params(params)

    logits = mlp_forward(x, prepared)
    jax.block_until_ready(logits)
    assert logits.shape == (B, OUT_FEATURES)

    # Reference in plain JAX with identical bf16-weight / f32-accumulate / bf16-intermediate math.
    w1, b1, w2, b2, w3, b3 = params
    bf = jnp.bfloat16
    xf = x.reshape(B, -1).astype(bf)
    h1 = jnp.maximum(
        jnp.dot(xf, w1.astype(bf), preferred_element_type=jnp.float32) + b1, 0.0).astype(bf)
    h2 = jnp.maximum(
        jnp.dot(h1, w2.astype(bf), preferred_element_type=jnp.float32) + b2, 0.0).astype(bf)
    ref = jnp.dot(h2, w3.astype(bf), preferred_element_type=jnp.float32) + b3

    assert jnp.allclose(logits, ref, atol=1e-2, rtol=1e-2), float(jnp.max(jnp.abs(logits - ref)))
    print("KERNEL_OK")
</pallas_src>

<mosaic_0001>
module attributes {stable_mosaic.version = 11 : i64} {
  func.func @mlp_kernel(%arg0: i32, %arg1: memref<8x784xf32, #tpu.memory_space<vmem>>, %arg2: memref<784x512xbf16, #tpu.memory_space<vmem>>, %arg3: memref<1x512xf32, #tpu.memory_space<vmem>>, %arg4: memref<512x512xbf16, #tpu.memory_space<vmem>>, %arg5: memref<1x512xf32, #tpu.memory_space<vmem>>, %arg6: memref<512x128xbf16, #tpu.memory_space<vmem>>, %arg7: memref<1x128xf32, #tpu.memory_space<vmem>>, %arg8: memref<8x128xf32, #tpu.memory_space<vmem>>) attributes {dimension_semantics = [#tpu.dimension_semantics<parallel>], iteration_bounds = array<i64: 1>, scalar_prefetch = 0 : i64, scratch_operands = 0 : i64, tpu.core_type = #tpu.core_type<tc>, window_params = [{transform_indices = @transform_0, window_bounds = array<i64: 8, 784>}, {pipeline_mode = #tpu.pipeline_mode<synchronous>, transform_indices = @transform_1, window_bounds = array<i64: 784, 512>}, {pipeline_mode = #tpu.pipeline_mode<synchronous>, transform_indices = @transform_2, window_bounds = array<i64: 1, 512>}, {pipeline_mode = #tpu.pipeline_mode<synchronous>, transform_indices = @transform_3, window_bounds = array<i64: 512, 512>}, {pipeline_mode = #tpu.pipeline_mode<synchronous>, transform_indices = @transform_4, window_bounds = array<i64: 1, 512>}, {pipeline_mode = #tpu.pipeline_mode<synchronous>, transform_indices = @transform_5, window_bounds = array<i64: 512, 128>}, {pipeline_mode = #tpu.pipeline_mode<synchronous>, transform_indices = @transform_6, window_bounds = array<i64: 1, 128>}, {transform_indices = @transform_7, window_bounds = array<i64: 8, 128>}]} {
    %c0 = arith.constant 0 : index
    %c0_0 = arith.constant 0 : index
    %0 = vector.load %arg1[%c0, %c0_0] : memref<8x784xf32, #tpu.memory_space<vmem>>, vector<8x784xf32>
    %1 = arith.truncf %0 : vector<8x784xf32> to vector<8x784xbf16>
    %c0_1 = arith.constant 0 : index
    %c0_2 = arith.constant 0 : index
    %2 = vector.load %arg2[%c0_1, %c0_2] : memref<784x512xbf16, #tpu.memory_space<vmem>>, vector<784x512xbf16>
    %cst = arith.constant dense<0.000000e+00> : vector<8x512xf32>
    %3 = tpu.matmul %1, %2, %cst {dimension_numbers = #tpu.dot_dimension_numbers<[1], [0], [0], [1], [0, 0, 1, 1], [], []>} : vector<8x784xbf16>, vector<784x512xbf16>, vector<8x512xf32> -> vector<8x512xf32>
    %c0_3 = arith.constant 0 : index
    %c0_4 = arith.constant 0 : index
    %4 = vector.load %arg3[%c0_3, %c0_4] : memref<1x512xf32, #tpu.memory_space<vmem>>, vector<1x512xf32>
    %5 = vector.broadcast %4 : vector<1x512xf32> to vector<8x512xf32>
    %6 = arith.addf %3, %5 : vector<8x512xf32>
    %cst_5 = arith.constant 0.000000e+00 : f32
    %7 = vector.broadcast %cst_5 : f32 to vector<8x512xf32>
    %8 = arith.maximumf %6, %7 : vector<8x512xf32>
    %9 = arith.truncf %8 : vector<8x512xf32> to vector<8x512xbf16>
    %c0_6 = arith.constant 0 : index
    %c0_7 = arith.constant 0 : index
    %10 = vector.load %arg4[%c0_6, %c0_7] : memref<512x512xbf16, #tpu.memory_space<vmem>>, vector<512x512xbf16>
    %cst_8 = arith.constant dense<0.000000e+00> : vector<8x512xf32>
    %11 = tpu.matmul %9, %10, %cst_8 {dimension_numbers = #tpu.dot_dimension_numbers<[1], [0], [0], [1], [0, 0, 1, 1], [], []>} : vector<8x512xbf16>, vector<512x512xbf16>, vector<8x512xf32> -> vector<8x512xf32>
    %c0_9 = arith.constant 0 : index
    %c0_10 = arith.constant 0 : index
    %12 = vector.load %arg5[%c0_9, %c0_10] : memref<1x512xf32, #tpu.memory_space<vmem>>, vector<1x512xf32>
    %13 = vector.broadcast %12 : vector<1x512xf32> to vector<8x512xf32>
    %14 = arith.addf %11, %13 : vector<8x512xf32>
    %cst_11 = arith.constant 0.000000e+00 : f32
    %15 = vector.broadcast %cst_11 : f32 to vector<8x512xf32>
    %16 = arith.maximumf %14, %15 : vector<8x512xf32>
    %17 = arith.truncf %16 : vector<8x512xf32> to vector<8x512xbf16>
    %c0_12 = arith.constant 0 : index
    %c0_13 = arith.constant 0 : index
    %18 = vector.load %arg6[%c0_12, %c0_13] : memref<512x128xbf16, #tpu.memory_space<vmem>>, vector<512x128xbf16>
    %cst_14 = arith.constant dense<0.000000e+00> : vector<8x128xf32>
    %19 = tpu.matmul %17, %18, %cst_14 {dimension_numbers = #tpu.dot_dimension_numbers<[1], [0], [0], [1], [0, 0, 1, 1], [], []>} : vector<8x512xbf16>, vector<512x128xbf16>, vector<8x128xf32> -> vector<8x128xf32>
    %c0_15 = arith.constant 0 : index
    %c0_16 = arith.constant 0 : index
    %20 = vector.load %arg7[%c0_15, %c0_16] : memref<1x128xf32, #tpu.memory_space<vmem>>, vector<1x128xf32>
    %21 = vector.broadcast %20 : vector<1x128xf32> to vector<8x128xf32>
    %22 = arith.addf %19, %21 : vector<8x128xf32>
    %c0_17 = arith.constant 0 : index
    %c0_18 = arith.constant 0 : index
    %23 = vector.load %arg8[%c0_17, %c0_18] : memref<8x128xf32, #tpu.memory_space<vmem>>, vector<8x128xf32>
    tpu.vector_store %arg8[%c0_17, %c0_18], %22 {strides = array<i32>} : memref<8x128xf32, #tpu.memory_space<vmem>>, vector<8x128xf32>,
    return
  }
  func.func @transform_0(%arg0: i32) -> (i32, i32) {
    %c0_i32 = arith.constant 0 : i32
    %c0_i32_0 = arith.constant 0 : i32
    return %arg0, %c0_i32 : i32, i32
  }
  func.func @transform_1(%arg0: i32) -> (i32, i32) {
    %c0_i32 = arith.constant 0 : i32
    %c0_i32_0 = arith.constant 0 : i32
    %c0_i32_1 = arith.constant 0 : i32
    return %c0_i32, %c0_i32_0 : i32, i32
  }
  func.func @transform_2(%arg0: i32) -> (i32, i32) {
    %c0_i32 = arith.constant 0 : i32
    %c0_i32_0 = arith.constant 0 : i32
    %c0_i32_1 = arith.constant 0 : i32
    return %c0_i32, %c0_i32_0 : i32, i32
  }
  func.func @transform_3(%arg0: i32) -> (i32, i32) {
    %c0_i32 = arith.constant 0 : i32
    %c0_i32_0 = arith.constant 0 : i32
    %c0_i32_1 = arith.constant 0 : i32
    return %c0_i32, %c0_i32_0 : i32, i32
  }
  func.func @transform_4(%arg0: i32) -> (i32, i32) {
    %c0_i32 = arith.constant 0 : i32
    %c0_i32_0 = arith.constant 0 : i32
    %c0_i32_1 = arith.constant 0 : i32
    return %c0_i32, %c0_i32_0 : i32, i32
  }
  func.func @transform_5(%arg0: i32) -> (i32, i32) {
    %c0_i32 = arith.constant 0 : i32
    %c0_i32_0 = arith.constant 0 : i32
    %c0_i32_1 = arith.constant 0 : i32
    return %c0_i32, %c0_i32_0 : i32, i32
  }
  func.func @transform_6(%arg0: i32) -> (i32, i32) {
    %c0_i32 = arith.constant 0 : i32
    %c0_i32_0 = arith.constant 0 : i32
    %c0_i32_1 = arith.constant 0 : i32
    return %c0_i32, %c0_i32_0 : i32, i32
  }
  func.func @transform_7(%arg0: i32) -> (i32, i32) {
    %c0_i32 = arith.constant 0 : i32
    %c0_i32_0 = arith.constant 0 : i32
    return %arg0, %c0_i32 : i32, i32
  }
}

</mosaic_0001>

<llo_original>
// kernel: mlp_forward.1
$region0: #{mlp_forward.1}
  #allocation0 [shape = 'u32[]', space=smem, size = 0x4, offset = 0x4, fixed_abs, tag = 'smem constant byte address 0x4 - core index']
  #allocation1 [shape = 'u32[72,128]{1,0:T(1,128)}', space=vmem, size = 0x9000, scoped, tag = 'internal scratch']
  %s0 = inlined_call_operand.vmem [shape: f32[8,784], index: 0, kind: input, shape index: {}]
  %s1 = inlined_call_operand.hbm [shape: bf16[784,512], index: 1, kind: input, shape index: {}]
  %s2 = inlined_call_operand.vmem [shape: f32[1,512], index: 2, kind: input, shape index: {}]
  %s3 = inlined_call_operand.hbm [shape: bf16[512,512], index: 3, kind: input, shape index: {}]
  %s4 = inlined_call_operand.vmem [shape: f32[1,512], index: 4, kind: input, shape index: {}]
  %s5 = inlined_call_operand.vmem [shape: bf16[512,128], index: 5, kind: input, shape index: {}]
  %s6 = inlined_call_operand.vmem [shape: f32[1,128], index: 6, kind: input, shape index: {}]
  %s7 = inlined_call_operand.hbm [shape: f32[8,128], index: 7, kind: output, shape index: {}]
  %s8 = sld [smem:[#allocation0]]
  $region46: #{mlp_forward.1} parent=0
    _
  %s10 = ssub.s32 1, %s8
  %s11 = scalar_select 0, %s10, %s8
  $region1: #{mlp_forward.1} parent=0
    #allocation2 [shape = 'u8[802816]{0}', space=vmem, size = 0xc4000, scoped, tag = 'input window, operand 1, single buffered']
    #allocation3 [shape = 's32[1]{0}', space=sflag, size = 0x4, scoped, tag = 'scoped memory for mlp_forward.1']
    #allocation4 [shape = 's32[1]{0}', space=sflag, size = 0x4, scoped, tag = 'scoped memory for mlp_forward.1']
    #allocation5 [shape = 'u8[524288]{0}', space=vmem, size = 0x80000, scoped, tag = 'input window, operand 3, single buffered']
    #allocation6 [shape = 's32[1]{0}', space=sflag, size = 0x4, scoped, tag = 'scoped memory for mlp_forward.1']
    #allocation7 [shape = 'u8[4096]{0}', space=vmem, size = 0x1000, scoped, tag = 'output window, operand 0, single buffered']
    %12 = vsyncpa [#allocation3], 0
    %13 = vsyncpa [#allocation6], 0
    %14 = vsyncpa [#allocation4], 0
    // Predicated region
    $region2: #{mlp_forward.1} parent=1 // pred_check
      _
    $region3: #{mlp_forward.1} parent=1 // pred_check_branch
      %16 = sbr.rel (0) target = $region5
    $region4: #{mlp_forward.1} parent=1 // pred_region
      _
    $region5: #{mlp_forward.1} parent=1 // pred_fallthru
      _
    // Predicated region
    $region6: #{mlp_forward.1} parent=1 // pred_check
      _
    $region7: #{mlp_forward.1} parent=1 // pred_check_branch
      %18 = sbr.rel (0) target = $region9
    $region8: #{mlp_forward.1} parent=1 // pred_region
      %20 = vsyncadd [#allocation3], 0
      %s21 = sshll.u32 %s1, 4
      %s22 = int_to_ptr.hbm [resolvable:$true] %s21
      %s23 = sshll.u32 [#allocation2], 4
      %s24 = int_to_ptr.vmem [resolvable:$true] %s23
      %29 = dma.hbm_to_vmem [thread:$0]  %s22, 25088, %s24, [#allocation3], 256, 256, 16
    $region9: #{mlp_forward.1} parent=1 // pred_fallthru
      _
    // Predicated region
    $region10: #{mlp_forward.1} parent=1 // pred_check
      _
    $region11: #{mlp_forward.1} parent=1 // pred_check_branch
      %31 = sbr.rel (0) target = $region13
    $region12: #{mlp_forward.1} parent=1 // pred_region
      _
    $region13: #{mlp_forward.1} parent=1 // pred_fallthru
      _
    // Predicated region
    $region14: #{mlp_forward.1} parent=1 // pred_check
      _
    $region15: #{mlp_forward.1} parent=1 // pred_check_branch
      %33 = sbr.rel (0) target = $region17
    $region16: #{mlp_forward.1} parent=1 // pred_region
      %35 = vsyncadd [#allocation6], 0
      %s36 = sshll.u32 %s3, 4
      %s37 = int_to_ptr.hbm [resolvable:$true] %s36
      %s38 = sshll.u32 [#allocation5], 4
      %s39 = int_to_ptr.vmem [resolvable:$true] %s38
      %44 = dma.hbm_to_vmem [thread:$0]  %s37, 16384, %s39, [#allocation6], 256, 256, 16
    $region17: #{mlp_forward.1} parent=1 // pred_fallthru
      _
    // Predicated region
    $region18: #{mlp_forward.1} parent=1 // pred_check
      _
    $region19: #{mlp_forward.1} parent=1 // pred_check_branch
      %46 = sbr.rel (0) target = $region21
    $region20: #{mlp_forward.1} parent=1 // pred_region
      _
    $region21: #{mlp_forward.1} parent=1 // pred_fallthru
      _
    // Predicated region
    $region22: #{mlp_forward.1} parent=1 // pred_check
      _
    $region23: #{mlp_forward.1} parent=1 // pred_check_branch
      %48 = sbr.rel (0) target = $region25
    $region24: #{mlp_forward.1} parent=1 // pred_region
      _
    $region25: #{mlp_forward.1} parent=1 // pred_fallthru
      _
    // Predicated region
    $region26: #{mlp_forward.1} parent=1 // pred_check
      _
    $region27: #{mlp_forward.1} parent=1 // pred_check_branch
      %50 = sbr.rel (0) target = $region29
    $region28: #{mlp_forward.1} parent=1 // pred_region
      _
    $region29: #{mlp_forward.1} parent=1 // pred_fallthru
      _
    // Predicated region
    $region30: #{mlp_forward.1} parent=1 // pred_check
      _
    $region31: #{mlp_forward.1} parent=1 // pred_check_branch
      %52 = sbr.rel (0) target = $region33
    $region32: #{mlp_forward.1} parent=1 // pred_region
      %54 = dma.done [#allocation3], 25088
    $region33: #{mlp_forward.1} parent=1 // pred_fallthru
      _
    // Predicated region
    $region34: #{mlp_forward.1} parent=1 // pred_check
      _
    $region35: #{mlp_forward.1} parent=1 // pred_check_branch
      %56 = sbr.rel (0) target = $region37
    $region36: #{mlp_forward.1} parent=1 // pred_region
      %58 = dma.done [#allocation6], 16384
    $region37: #{mlp_forward.1} parent=1 // pred_fallthru
      _
    %v60 = vld [vmem:[%s0] sm:$0xff]
    %v61 = vld [vmem:[%s0 + $0x8] sm:$0xff]
    %v62 = vld [vmem:[%s0 + $0x10] sm:$0xff]
    %v63 = vld [vmem:[%s0 + $0x18] sm:$0xff]
    %v64 = vld [vmem:[%s0 + $0x20] sm:$0xff]
    %v65 = vld [vmem:[%s0 + $0x28] sm:$0xff]
    %v66 = vld [vmem:[%s0 + $0x30] sm:$0xff]
    %v67 = vpack.c.bf16 %v60, %v60
    %v68 = vpack.c.bf16 %v61, %v61
    %v69 = vpack.c.bf16 %v62, %v62
    %v70 = vpack.c.bf16 %v63, %v63
    %v71 = vpack.c.bf16 %v64, %v64
    %v72 = vpack.c.bf16 %v65, %v65
    %v73 = vpack.c.bf16 %v66, %v66
    %v74 = vld [vmem:[#allocation2] sm:$0xff]
    %v75 = vld [vmem:[#allocation2 + $0x8] sm:$0xff]
    %v76 = vld [vmem:[#allocation2 + $0x10] sm:$0xff]
    %v77 = vld [vmem:[#allocation2 + $0x18] sm:$0xff]
    %v78 = vld [vmem:[#allocation2 + $0x20] sm:$0xff]
    %v79 = vld [vmem:[#allocation2 + $0x28] sm:$0xff]
    %v80 = vld [vmem:[#allocation2 + $0x30] sm:$0xff]
    %v81 = vld [vmem:[#allocation2 + $0x38] sm:$0xff]
    %v82 = vld [vmem:[#allocation2 + $0x40] sm:$0xff]
    %v83 = vld [vmem:[#allocation2 + $0x48] sm:$0xff]
    %v84 = vld [vmem:[#allocation2 + $0x50] sm:$0xff]
    %v85 = vld [vmem:[#allocation2 + $0x58] sm:$0xff]
    %v86 = vld [vmem:[#allocation2 + $0x60] sm:$0xff]
    %v87 = vld [vmem:[#allocation2 + $0x68] sm:$0xff]
    %v88 = vld [vmem:[#allocation2 + $0x70] sm:$0xff]
    %v89 = vld [vmem:[#allocation2 + $0x78] sm:$0xff]
    %v90 = vld [vmem:[#allocation2 + $0x80] sm:$0xff]
    %v91 = vld [vmem:[#allocation2 + $0x88] sm:$0xff]
    %v92 = vld [vmem:[#allocation2 + $0x90] sm:$0xff]
    %v93 = vld [vmem:[#allocation2 + $0x98] sm:$0xff]
    %v94 = vld [vmem:[#allocation2 + $0xa0] sm:$0xff]
    %v95 = vld [vmem:[#allocation2 + $0xa8] sm:$0xff]
    %v96 = vld [vmem:[#allocation2 + $0xb0] sm:$0xff]
    %v97 = vld [vmem:[#allocation2 + $0xb8] sm:$0xff]
    %v98 = vld [vmem:[#allocation2 + $0xc0] sm:$0xff]
    %v99 = vld [vmem:[#allocation2 + $0xc8] sm:$0xff]
    %v100 = vld [vmem:[#allocation2 + $0xd0] sm:$0xff]
    %v101 = vld [vmem:[#allocation2 + $0xd8] sm:$0xff]
    %v102 = vld [vmem:[#allocation2 + $0xe0] sm:$0xff]
    %v103 = vld [vmem:[#allocation2 + $0xe8] sm:$0xff]
    %v104 = vld [vmem:[#allocation2 + $0xf0] sm:$0xff]
    %v105 = vld [vmem:[#allocation2 + $0xf8] sm:$0xff]
    %v106 = vld [vmem:[#allocation2 + $0x100] sm:$0xff]
    %v107 = vld [vmem:[#allocation2 + $0x108] sm:$0xff]
    %v108 = vld [vmem:[#allocation2 + $0x110] sm:$0xff]
    %v109 = vld [vmem:[#allocation2 + $0x118] sm:$0xff]
    %v110 = vld [vmem:[#allocation2 + $0x120] sm:$0xff]
    %v111 = vld [vmem:[#allocation2 + $0x128] sm:$0xff]
    %v112 = vld [vmem:[#allocation2 + $0x130] sm:$0xff]
    %v113 = vld [vmem:[#allocation2 + $0x138] sm:$0xff]
    %v114 = vld [vmem:[#allocation2 + $0x140] sm:$0xff]
    %v115 = vld [vmem:[#allocation2 + $0x148] sm:$0xff]
    %v116 = vld [vmem:[#allocation2 + $0x150] sm:$0xff]
    %v117 = vld [vmem:[#allocation2 + $0x158] sm:$0xff]
    %v118 = vld [vmem:[#allocation2 + $0x160] sm:$0xff]
    %v119 = vld [vmem:[#allocation2 + $0x168] sm:$0xff]
    %v120 = vld [vmem:[#allocation2 + $0x170] sm:$0xff]
    %v121 = vld [vmem:[#allocation2 + $0x178] sm:$0xff]
    %v122 = vld [vmem:[#allocation2 + $0x180] sm:$0xff]
    %v123 = vld [vmem:[#allocation2 + $0x188] sm:$0xff]
    %v124 = vld [vmem:[#allocation2 + $0x190] sm:$0xff]
    %v125 = vld [vmem:[#allocation2 + $0x198] sm:$0xff]
    %v126 = vld [vmem:[#allocation2 + $0x1a0] sm:$0xff]
    %v127 = vld [vmem:[#allocation2 + $0x1a8] sm:$0xff]
    %v128 = vld [vmem:[#allocation2 + $0x1b0] sm:$0xff]
    %v129 = vld [vmem:[#allocation2 + $0x1b8] sm:$0xff]
    %v130 = vld [vmem:[#allocation2 + $0x1c0] sm:$0xff]
    %v131 = vld [vmem:[#allocation2 + $0x1c8] sm:$0xff]
    %v132 = vld [vmem:[#allocation2 + $0x1d0] sm:$0xff]
    %v133 = vld [vmem:[#allocation2 + $0x1d8] sm:$0xff]
    %v134 = vld [vmem:[#allocation2 + $0x1e0] sm:$0xff]
    %v135 = vld [vmem:[#allocation2 + $0x1e8] sm:$0xff]
    %v136 = vld [vmem:[#allocation2 + $0x1f0] sm:$0xff]
    %v137 = vld [vmem:[#allocation2 + $0x1f8] sm:$0xff]
    %v138 = vld [vmem:[#allocation2 + $0x200] sm:$0xff]
    %v139 = vld [vmem:[#allocation2 + $0x208] sm:$0xff]
    %v140 = vld [vmem:[#allocation2 + $0x210] sm:$0xff]
    %v141 = vld [vmem:[#allocation2 + $0x218] sm:$0xff]
    %v142 = vld [vmem:[#allocation2 + $0x220] sm:$0xff]
    %v143 = vld [vmem:[#allocation2 + $0x228] sm:$0xff]
    %v144 = vld [vmem:[#allocation2 + $0x230] sm:$0xff]
    %v145 = vld [vmem:[#allocation2 + $0x238] sm:$0xff]
    %v146 = vld [vmem:[#allocation2 + $0x240] sm:$0xff]
    %v147 = vld [vmem:[#allocation2 + $0x248] sm:$0xff]
    %v148 = vld [vmem:[#allocation2 + $0x250] sm:$0xff]
    %v149 = vld [vmem:[#allocation2 + $0x258] sm:$0xff]
    %v150 = vld [vmem:[#allocation2 + $0x260] sm:$0xff]
    %v151 = vld [vmem:[#allocation2 + $0x268] sm:$0xff]
    %v152 = vld [vmem:[#allocation2 + $0x270] sm:$0xff]
    %v153 = vld [vmem:[#allocation2 + $0x278] sm:$0xff]
    %v154 = vld [vmem:[#allocation2 + $0x280] sm:$0xff]
    %v155 = vld [vmem:[#allocation2 + $0x288] sm:$0xff]
    %v156 = vld [vmem:[#allocation2 + $0x290] sm:$0xff]
    %v157 = vld [vmem:[#allocation2 + $0x298] sm:$0xff]
    %v158 = vld [vmem:[#allocation2 + $0x2a0] sm:$0xff]
    %v159 = vld [vmem:[#allocation2 + $0x2a8] sm:$0xff]
    %v160 = vld [vmem:[#allocation2 + $0x2b0] sm:$0xff]
    %v161 = vld [vmem:[#allocation2 + $0x2b8] sm:$0xff]
    %v162 = vld [vmem:[#allocation2 + $0x2c0] sm:$0xff]
    %v163 = vld [vmem:[#allocation2 + $0x2c8] sm:$0xff]
    %v164 = vld [vmem:[#allocation2 + $0x2d0] sm:$0xff]
    %v165 = vld [vmem:[#allocation2 + $0x2d8] sm:$0xff]
    %v166 = vld [vmem:[#allocation2 + $0x2e0] sm:$0xff]
    %v167 = vld [vmem:[#allocation2 + $0x2e8] sm:$0xff]
    %v168 = vld [vmem:[#allocation2 + $0x2f0] sm:$0xff]
    %v169 = vld [vmem:[#allocation2 + $0x2f8] sm:$0xff]
    %v170 = vld [vmem:[#allocation2 + $0x300] sm:$0xff]
    %v171 = vld [vmem:[#allocation2 + $0x308] sm:$0xff]
    %v172 = vld [vmem:[#allocation2 + $0x310] sm:$0xff]
    %v173 = vld [vmem:[#allocation2 + $0x318] sm:$0xff]
    %v174 = vld [vmem:[#allocation2 + $0x320] sm:$0xff]
    %v175 = vld [vmem:[#allocation2 + $0x328] sm:$0xff]
    %v176 = vld [vmem:[#allocation2 + $0x330] sm:$0xff]
    %v177 = vld [vmem:[#allocation2 + $0x338] sm:$0xff]
    %v178 = vld [vmem:[#allocation2 + $0x340] sm:$0xff]
    %v179 = vld [vmem:[#allocation2 + $0x348] sm:$0xff]
    %v180 = vld [vmem:[#allocation2 + $0x350] sm:$0xff]
    %v181 = vld [vmem:[#allocation2 + $0x358] sm:$0xff]
    %v182 = vld [vmem:[#allocation2 + $0x360] sm:$0xff]
    %v183 = vld [vmem:[#allocation2 + $0x368] sm:$0xff]
    %v184 = vld [vmem:[#allocation2 + $0x370] sm:$0xff]
    %v185 = vld [vmem:[#allocation2 + $0x378] sm:$0xff]
    %v186 = vld [vmem:[#allocation2 + $0x380] sm:$0xff]
    %v187 = vld [vmem:[#allocation2 + $0x388] sm:$0xff]
    %v188 = vld [vmem:[#allocation2 + $0x390] sm:$0xff]
    %v189 = vld [vmem:[#allocation2 + $0x398] sm:$0xff]
    %v190 = vld [vmem:[#allocation2 + $0x3a0] sm:$0xff]
    %v191 = vld [vmem:[#allocation2 + $0x3a8] sm:$0xff]
    %v192 = vld [vmem:[#allocation2 + $0x3b0] sm:$0xff]
    %v193 = vld [vmem:[#allocation2 + $0x3b8] sm:$0xff]
    %v194 = vld [vmem:[#allocation2 + $0x3c0] sm:$0xff]
    %v195 = vld [vmem:[#allocation2 + $0x3c8] sm:$0xff]
    %v196 = vld [vmem:[#allocation2 + $0x3d0] sm:$0xff]
    %v197 = vld [vmem:[#allocation2 + $0x3d8] sm:$0xff]
    %v198 = vld [vmem:[#allocation2 + $0x3e0] sm:$0xff]
    %v199 = vld [vmem:[#allocation2 + $0x3e8] sm:$0xff]
    %v200 = vld [vmem:[#allocation2 + $0x3f0] sm:$0xff]
    %v201 = vld [vmem:[#allocation2 + $0x3f8] sm:$0xff]
    %v202 = vld [vmem:[#allocation2 + $0x400] sm:$0xff]
    %v203 = vld [vmem:[#allocation2 + $0x408] sm:$0xff]
    %v204 = vld [vmem:[#allocation2 + $0x410] sm:$0xff]
    %v205 = vld [vmem:[#allocation2 + $0x418] sm:$0xff]
    %v206 = vld [vmem:[#allocation2 + $0x420] sm:$0xff]
    %v207 = vld [vmem:[#allocation2 + $0x428] sm:$0xff]
    %v208 = vld [vmem:[#allocation2 + $0x430] sm:$0xff]
    %v209 = vld [vmem:[#allocation2 + $0x438] sm:$0xff]
    %v210 = vld [vmem:[#allocation2 + $0x440] sm:$0xff]
    %v211 = vld [vmem:[#allocation2 + $0x448] sm:$0xff]
    %v212 = vld [vmem:[#allocation2 + $0x450] sm:$0xff]
    %v213 = vld [vmem:[#allocation2 + $0x458] sm:$0xff]
    %v214 = vld [vmem:[#allocation2 + $0x460] sm:$0xff]
    %v215 = vld [vmem:[#allocation2 + $0x468] sm:$0xff]
    %v216 = vld [vmem:[#allocation2 + $0x470] sm:$0xff]
    %v217 = vld [vmem:[#allocation2 + $0x478] sm:$0xff]
    %v218 = vld [vmem:[#allocation2 + $0x480] sm:$0xff]
    %v219 = vld [vmem:[#allocation2 + $0x488] sm:$0xff]
    %v220 = vld [vmem:[#allocation2 + $0x490] sm:$0xff]
    %v221 = vld [vmem:[#allocation2 + $0x498] sm:$0xff]
    %v222 = vld [vmem:[#allocation2 + $0x4a0] sm:$0xff]
    %v223 = vld [vmem:[#allocation2 + $0x4a8] sm:$0xff]
    %v224 = vld [vmem:[#allocation2 + $0x4b0] sm:$0xff]
    %v225 = vld [vmem:[#allocation2 + $0x4b8] sm:$0xff]
    %v226 = vld [vmem:[#allocation2 + $0x4c0] sm:$0xff]
    %v227 = vld [vmem:[#allocation2 + $0x4c8] sm:$0xff]
    %v228 = vld [vmem:[#allocation2 + $0x4d0] sm:$0xff]
    %v229 = vld [vmem:[#allocation2 + $0x4d8] sm:$0xff]
    %v230 = vld [vmem:[#allocation2 + $0x4e0] sm:$0xff]
    %v231 = vld [vmem:[#allocation2 + $0x4e8] sm:$0xff]
    %v232 = vld [vmem:[#allocation2 + $0x4f0] sm:$0xff]
    %v233 = vld [vmem:[#allocation2 + $0x4f8] sm:$0xff]
    %v234 = vld [vmem:[#allocation2 + $0x500] sm:$0xff]
    %v235 = vld [vmem:[#allocation2 + $0x508] sm:$0xff]
    %v236 = vld [vmem:[#allocation2 + $0x510] sm:$0xff]
    %v237 = vld [vmem:[#allocation2 + $0x518] sm:$0xff]
    %v238 = vld [vmem:[#allocation2 + $0x520] sm:$0xff]
    %v239 = vld [vmem:[#allocation2 + $0x528] sm:$0xff]
    %v240 = vld [vmem:[#allocation2 + $0x530] sm:$0xff]
    %v241 = vld [vmem:[#allocation2 + $0x538] sm:$0xff]
    %v242 = vld [vmem:[#allocation2 + $0x540] sm:$0xff]
    %v243 = vld [vmem:[#allocation2 + $0x548] sm:$0xff]
    %v244 = vld [vmem:[#allocation2 + $0x550] sm:$0xff]
    %v245 = vld [vmem:[#allocation2 + $0x558] sm:$0xff]
    %v246 = vld [vmem:[#allocation2 + $0x560] sm:$0xff]
    %v247 = vld [vmem:[#allocation2 + $0x568] sm:$0xff]
    %v248 = vld [vmem:[#allocation2 + $0x570] sm:$0xff]
    %v249 = vld [vmem:[#allocation2 + $0x578] sm:$0xff]
    %v250 = vld [vmem:[#allocation2 + $0x580] sm:$0xff]
    %v251 = vld [vmem:[#allocation2 + $0x588] sm:$0xff]
    %v252 = vld [vmem:[#allocation2 + $0x590] sm:$0xff]
    %v253 = vld [vmem:[#allocation2 + $0x598] sm:$0xff]
    %v254 = vld [vmem:[#allocation2 + $0x5a0] sm:$0xff]
    %v255 = vld [vmem:[#allocation2 + $0x5a8] sm:$0xff]
    %v256 = vld [vmem:[#allocation2 + $0x5b0] sm:$0xff]
    %v257 = vld [vmem:[#allocation2 + $0x5b8] sm:$0xff]
    %v258 = vld [vmem:[#allocation2 + $0x5c0] sm:$0xff]
    %v259 = vld [vmem:[#allocation2 + $0x5c8] sm:$0xff]
    %v260 = vld [vmem:[#allocation2 + $0x5d0] sm:$0xff]
    %v261 = vld [vmem:[#allocation2 + $0x5d8] sm:$0xff]
    %v262 = vld [vmem:[#allocation2 + $0x5e0] sm:$0xff]
    %v263 = vld [vmem:[#allocation2 + $0x5e8] sm:$0xff]
    %v264 = vld [vmem:[#allocation2 + $0x5f0] sm:$0xff]
    %v265 = vld [vmem:[#allocation2 + $0x5f8] sm:$0xff]
    %v266 = vld [vmem:[#allocation2 + $0x600] sm:$0xff]
    %v267 = vld [vmem:[#allocation2 + $0x608] sm:$0xff]
    %v268 = vld [vmem:[#allocation2 + $0x610] sm:$0xff]
    %v269 = vld [vmem:[#allocation2 + $0x618] sm:$0xff]
    %v270 = vld [vmem:[%s2] sm:$0xf]
    %v272 = vperm.slane %v270, 0
    %v273 = vperm.slane %v270, 1
    %v274 = vperm.slane %v270, 2
    %v275 = vperm.slane %v270, 3
    %v476 = vunpack.c.l.b16 %v74
    %v477 = vunpack.c.h.b16 %v74
    %v478 = vunpack.c.l.b16 %v75
    %v479 = vunpack.c.h.b16 %v75
    %v480 = vunpack.c.l.b16 %v76
    %v481 = vunpack.c.h.b16 %v76
    %v482 = vunpack.c.l.b16 %v77
    %v483 = vunpack.c.h.b16 %v77
    %v484 = vunpack.c.l.b16 %v78
    %v485 = vunpack.c.h.b16 %v78
    %v486 = vunpack.c.l.b16 %v79
    %v487 = vunpack.c.h.b16 %v79
    %v488 = vunpack.c.l.b16 %v80
    %v489 = vunpack.c.h.b16 %v80
    %v490 = vunpack.c.l.b16 %v81
    %v491 = vunpack.c.h.b16 %v81
    %v492 = vunpack.c.l.b16 %v82
    %v493 = vunpack.c.h.b16 %v82
    %v494 = vunpack.c.l.b16 %v83
    %v495 = vunpack.c.h.b16 %v83
    %v496 = vunpack.c.l.b16 %v84
    %v497 = vunpack.c.h.b16 %v84
    %v498 = vunpack.c.l.b16 %v85
    %v499 = vunpack.c.h.b16 %v85
    %v500 = vunpack.c.l.b16 %v86
    %v501 = vunpack.c.h.b16 %v86
    %v502 = vunpack.c.l.b16 %v87
    %v503 = vunpack.c.h.b16 %v87
    %v504 = vunpack.c.l.b16 %v88
    %v505 = vunpack.c.h.b16 %v88
    %v506 = vunpack.c.l.b16 %v89
    %v507 = vunpack.c.h.b16 %v89
    %v508 = vunpack.c.l.b16 %v90
    %v509 = vunpack.c.h.b16 %v90
    %v510 = vunpack.c.l.b16 %v91
    %v511 = vunpack.c.h.b16 %v91
    %v512 = vunpack.c.l.b16 %v92
    %v513 = vunpack.c.h.b16 %v92
    %v514 = vunpack.c.l.b16 %v93
    %v515 = vunpack.c.h.b16 %v93
    %v516 = vunpack.c.l.b16 %v94
    %v517 = vunpack.c.h.b16 %v94
    %v518 = vunpack.c.l.b16 %v95
    %v519 = vunpack.c.h.b16 %v95
    %v520 = vunpack.c.l.b16 %v96
    %v521 = vunpack.c.h.b16 %v96
    %v522 = vunpack.c.l.b16 %v97
    %v523 = vunpack.c.h.b16 %v97
    %v524 = vunpack.c.l.b16 %v98
    %v525 = vunpack.c.h.b16 %v98
    %v526 = vunpack.c.l.b16 %v99
    %v527 = vunpack.c.h.b16 %v99
    %v528 = vunpack.c.l.b16 %v100
    %v529 = vunpack.c.h.b16 %v100
    %v530 = vunpack.c.l.b16 %v101
    %v531 = vunpack.c.h.b16 %v101
    %v532 = vunpack.c.l.b16 %v102
    %v533 = vunpack.c.h.b16 %v102
    %v534 = vunpack.c.l.b16 %v103
    %v535 = vunpack.c.h.b16 %v103
    %v536 = vunpack.c.l.b16 %v104
    %v537 = vunpack.c.h.b16 %v104
    %v538 = vunpack.c.l.b16 %v105
    %v539 = vunpack.c.h.b16 %v105
    %v540 = vunpack.c.l.b16 %v106
    %v541 = vunpack.c.h.b16 %v106
    %v542 = vunpack.c.l.b16 %v107
    %v543 = vunpack.c.h.b16 %v107
    %v544 = vunpack.c.l.b16 %v108
    %v545 = vunpack.c.h.b16 %v108
    %v546 = vunpack.c.l.b16 %v109
    %v547 = vunpack.c.h.b16 %v109
    %v548 = vunpack.c.l.b16 %v110
    %v549 = vunpack.c.h.b16 %v110
    %v550 = vunpack.c.l.b16 %v111
    %v551 = vunpack.c.h.b16 %v111
    %v552 = vunpack.c.l.b16 %v112
    %v553 = vunpack.c.h.b16 %v112
    %v554 = vunpack.c.l.b16 %v113
    %v555 = vunpack.c.h.b16 %v113
    %v556 = vunpack.c.l.b16 %v114
    %v557 = vunpack.c.h.b16 %v114
    %v558 = vunpack.c.l.b16 %v115
    %v559 = vunpack.c.h.b16 %v115
    %v560 = vunpack.c.l.b16 %v116
    %v561 = vunpack.c.h.b16 %v116
    %v562 = vunpack.c.l.b16 %v117
    %v563 = vunpack.c.h.b16 %v117
    %v564 = vunpack.c.l.b16 %v118
    %v565 = vunpack.c.h.b16 %v118
    %v566 = vunpack.c.l.b16 %v119
    %v567 = vunpack.c.h.b16 %v119
    %v568 = vunpack.c.l.b16 %v120
    %v569 = vunpack.c.h.b16 %v120
    %v570 = vunpack.c.l.b16 %v121
    %v571 = vunpack.c.h.b16 %v121
    %v572 = vunpack.c.l.b16 %v122
    %v573 = vunpack.c.h.b16 %v122
    %v574 = vunpack.c.l.b16 %v123
    %v575 = vunpack.c.h.b16 %v123
    %v576 = vunpack.c.l.b16 %v124
    %v577 = vunpack.c.h.b16 %v124
    %v578 = vunpack.c.l.b16 %v125
    %v579 = vunpack.c.h.b16 %v125
    %v580 = vunpack.c.l.b16 %v126
    %v581 = vunpack.c.h.b16 %v126
    %v582 = vunpack.c.l.b16 %v127
    %v583 = vunpack.c.h.b16 %v127
    %v584 = vunpack.c.l.b16 %v128
    %v585 = vunpack.c.h.b16 %v128
    %v586 = vunpack.c.l.b16 %v129
    %v587 = vunpack.c.h.b16 %v129
    %v588 = vunpack.c.l.b16 %v130
    %v589 = vunpack.c.h.b16 %v130
    %v590 = vunpack.c.l.b16 %v131
    %v591 = vunpack.c.h.b16 %v131
    %v592 = vunpack.c.l.b16 %v132
    %v593 = vunpack.c.h.b16 %v132
    %v594 = vunpack.c.l.b16 %v133
    %v595 = vunpack.c.h.b16 %v133
    %v596 = vunpack.c.l.b16 %v134
    %v597 = vunpack.c.h.b16 %v134
    %v598 = vunpack.c.l.b16 %v135
    %v599 = vunpack.c.h.b16 %v135
    %v600 = vunpack.c.l.b16 %v136
    %v601 = vunpack.c.h.b16 %v136
    %v602 = vunpack.c.l.b16 %v137
    %v603 = vunpack.c.h.b16 %v137
    %v604 = vunpack.c.l.b16 %v138
    %v605 = vunpack.c.h.b16 %v138
    %v606 = vunpack.c.l.b16 %v139
    %v607 = vunpack.c.h.b16 %v139
    %v608 = vunpack.c.l.b16 %v140
    %v609 = vunpack.c.h.b16 %v140
    %v610 = vunpack.c.l.b16 %v141
    %v611 = vunpack.c.h.b16 %v141
    %v612 = vunpack.c.l.b16 %v142
    %v613 = vunpack.c.h.b16 %v142
    %v614 = vunpack.c.l.b16 %v143
    %v615 = vunpack.c.h.b16 %v143
    %v616 = vunpack.c.l.b16 %v144
    %v617 = vunpack.c.h.b16 %v144
    %v618 = vunpack.c.l.b16 %v145
    %v619 = vunpack.c.h.b16 %v145
    %v620 = vunpack.c.l.b16 %v146
    %v621 = vunpack.c.h.b16 %v146
    %v622 = vunpack.c.l.b16 %v147
    %v623 = vunpack.c.h.b16 %v147
    %v624 = vunpack.c.l.b16 %v148
    %v625 = vunpack.c.h.b16 %v148
    %v626 = vunpack.c.l.b16 %v149
    %v627 = vunpack.c.h.b16 %v149
    %v628 = vunpack.c.l.b16 %v150
    %v629 = vunpack.c.h.b16 %v150
    %v630 = vunpack.c.l.b16 %v151
    %v631 = vunpack.c.h.b16 %v151
    %v632 = vunpack.c.l.b16 %v152
    %v633 = vunpack.c.h.b16 %v152
    %v634 = vunpack.c.l.b16 %v153
    %v635 = vunpack.c.h.b16 %v153
    %v636 = vunpack.c.l.b16 %v154
    %v637 = vunpack.c.h.b16 %v154
    %v638 = vunpack.c.l.b16 %v155
    %v639 = vunpack.c.h.b16 %v155
    %v640 = vunpack.c.l.b16 %v156
    %v641 = vunpack.c.h.b16 %v156
    %v642 = vunpack.c.l.b16 %v157
    %v643 = vunpack.c.h.b16 %v157
    %v644 = vunpack.c.l.b16 %v158
    %v645 = vunpack.c.h.b16 %v158
    %v646 = vunpack.c.l.b16 %v159
    %v647 = vunpack.c.h.b16 %v159
    %v648 = vunpack.c.l.b16 %v160
    %v649 = vunpack.c.h.b16 %v160
    %v650 = vunpack.c.l.b16 %v161
    %v651 = vunpack.c.h.b16 %v161
    %v652 = vunpack.c.l.b16 %v162
    %v653 = vunpack.c.h.b16 %v162
    %v654 = vunpack.c.l.b16 %v163
    %v655 = vunpack.c.h.b16 %v163
    %v656 = vunpack.c.l.b16 %v164
    %v657 = vunpack.c.h.b16 %v164
    %v658 = vunpack.c.l.b16 %v165
    %v659 = vunpack.c.h.b16 %v165
    %v660 = vunpack.c.l.b16 %v166
    %v661 = vunpack.c.h.b16 %v166
    %v662 = vunpack.c.l.b16 %v167
    %v663 = vunpack.c.h.b16 %v167
    %v664 = vunpack.c.l.b16 %v168
    %v665 = vunpack.c.h.b16 %v168
    %v666 = vunpack.c.l.b16 %v169
    %v667 = vunpack.c.h.b16 %v169
    %v668 = vunpack.c.l.b16 %v170
    %v669 = vunpack.c.h.b16 %v170
    %v670 = vunpack.c.l.b16 %v171
    %v671 = vunpack.c.h.b16 %v171
    %v672 = vunpack.c.l.b16 %v172
    %v673 = vunpack.c.h.b16 %v172
    %v674 = vunpack.c.l.b16 %v173
    %v675 = vunpack.c.h.b16 %v173
    %v676 = vunpack.c.l.b16 %v174
    %v677 = vunpack.c.h.b16 %v174
    %v678 = vunpack.c.l.b16 %v175
    %v679 = vunpack.c.h.b16 %v175
    %v680 = vunpack.c.l.b16 %v176
    %v681 = vunpack.c.h.b16 %v176
    %v682 = vunpack.c.l.b16 %v177
    %v683 = vunpack.c.h.b16 %v177
    %v684 = vunpack.c.l.b16 %v178
    %v685 = vunpack.c.h.b16 %v178
    %v686 = vunpack.c.l.b16 %v179
    %v687 = vunpack.c.h.b16 %v179
    %v688 = vunpack.c.l.b16 %v180
    %v689 = vunpack.c.h.b16 %v180
    %v690 = vunpack.c.l.b16 %v181
    %v691 = vunpack.c.h.b16 %v181
    %v692 = vunpack.c.l.b16 %v182
    %v693 = vunpack.c.h.b16 %v182
    %v694 = vunpack.c.l.b16 %v183
    %v695 = vunpack.c.h.b16 %v183
    %v696 = vunpack.c.l.b16 %v184
    %v697 = vunpack.c.h.b16 %v184
    %v698 = vunpack.c.l.b16 %v185
    %v699 = vunpack.c.h.b16 %v185
    %v700 = vunpack.c.l.b16 %v186
    %v701 = vunpack.c.h.b16 %v186
    %v702 = vunpack.c.l.b16 %v187
    %v703 = vunpack.c.h.b16 %v187
    %v704 = vunpack.c.l.b16 %v188
    %v705 = vunpack.c.h.b16 %v188
    %v706 = vunpack.c.l.b16 %v189
    %v707 = vunpack.c.h.b16 %v189
    %v708 = vunpack.c.l.b16 %v190
    %v709 = vunpack.c.h.b16 %v190
    %v710 = vunpack.c.l.b16 %v191
    %v711 = vunpack.c.h.b16 %v191
    %v712 = vunpack.c.l.b16 %v192
    %v713 = vunpack.c.h.b16 %v192
    %v714 = vunpack.c.l.b16 %v193
    %v715 = vunpack.c.h.b16 %v193
    %v716 = vunpack.c.l.b16 %v194
    %v717 = vunpack.c.h.b16 %v194
    %v718 = vunpack.c.l.b16 %v195
    %v719 = vunpack.c.h.b16 %v195
    %v720 = vunpack.c.l.b16 %v196
    %v721 = vunpack.c.h.b16 %v196
    %v722 = vunpack.c.l.b16 %v197
    %v723 = vunpack.c.h.b16 %v197
    %v724 = vunpack.c.l.b16 %v198
    %v725 = vunpack.c.h.b16 %v198
    %v726 = vunpack.c.l.b16 %v199
    %v727 = vunpack.c.h.b16 %v199
    %v728 = vunpack.c.l.b16 %v200
    %v729 = vunpack.c.h.b16 %v200
    %v730 = vunpack.c.l.b16 %v201
    %v731 = vunpack.c.h.b16 %v201
    %v732 = vunpack.c.l.b16 %v202
    %v733 = vunpack.c.h.b16 %v202
    %v734 = vunpack.c.l.b16 %v203
    %v735 = vunpack.c.h.b16 %v203
    %v736 = vunpack.c.l.b16 %v204
    %v737 = vunpack.c.h.b16 %v204
    %v738 = vunpack.c.l.b16 %v205
    %v739 = vunpack.c.h.b16 %v205
    %v740 = vunpack.c.l.b16 %v206
    %v741 = vunpack.c.h.b16 %v206
    %v742 = vunpack.c.l.b16 %v207
    %v743 = vunpack.c.h.b16 %v207
    %v744 = vunpack.c.l.b16 %v208
    %v745 = vunpack.c.h.b16 %v208
    %v746 = vunpack.c.l.b16 %v209
    %v747 = vunpack.c.h.b16 %v209
    %v748 = vunpack.c.l.b16 %v210
    %v749 = vunpack.c.h.b16 %v210
    %v750 = vunpack.c.l.b16 %v211
    %v751 = vunpack.c.h.b16 %v211
    %v752 = vunpack.c.l.b16 %v212
    %v753 = vunpack.c.h.b16 %v212
    %v754 = vunpack.c.l.b16 %v213
    %v755 = vunpack.c.h.b16 %v213
    %v756 = vunpack.c.l.b16 %v214
    %v757 = vunpack.c.h.b16 %v214
    %v758 = vunpack.c.l.b16 %v215
    %v759 = vunpack.c.h.b16 %v215
    %v760 = vunpack.c.l.b16 %v216
    %v761 = vunpack.c.h.b16 %v216
    %v762 = vunpack.c.l.b16 %v217
    %v763 = vunpack.c.h.b16 %v217
    %v764 = vunpack.c.l.b16 %v218
    %v765 = vunpack.c.h.b16 %v218
    %v766 = vunpack.c.l.b16 %v219
    %v767 = vunpack.c.h.b16 %v219
    %v768 = vunpack.c.l.b16 %v220
    %v769 = vunpack.c.h.b16 %v220
    %v770 = vunpack.c.l.b16 %v221
    %v771 = vunpack.c.h.b16 %v221
    %v772 = vunpack.c.l.b16 %v222
    %v773 = vunpack.c.h.b16 %v222
    %v774 = vunpack.c.l.b16 %v223
    %v775 = vunpack.c.h.b16 %v223
    %v776 = vunpack.c.l.b16 %v224
    %v777 = vunpack.c.h.b16 %v224
    %v778 = vunpack.c.l.b16 %v225
    %v779 = vunpack.c.h.b16 %v225
    %v780 = vunpack.c.l.b16 %v226
    %v781 = vunpack.c.h.b16 %v226
    %v782 = vunpack.c.l.b16 %v227
    %v783 = vunpack.c.h.b16 %v227
    %v784 = vunpack.c.l.b16 %v228
    %v785 = vunpack.c.h.b16 %v228
    %v786 = vunpack.c.l.b16 %v229
    %v787 = vunpack.c.h.b16 %v229
    %v788 = vunpack.c.l.b16 %v230
    %v789 = vunpack.c.h.b16 %v230
    %v790 = vunpack.c.l.b16 %v231
    %v791 = vunpack.c.h.b16 %v231
    %v792 = vunpack.c.l.b16 %v232
    %v793 = vunpack.c.h.b16 %v232
    %v794 = vunpack.c.l.b16 %v233
    %v795 = vunpack.c.h.b16 %v233
    %v796 = vunpack.c.l.b16 %v234
    %v797 = vunpack.c.h.b16 %v234
    %v798 = vunpack.c.l.b16 %v235
    %v799 = vunpack.c.h.b16 %v235
    %v800 = vunpack.c.l.b16 %v236
    %v801 = vunpack.c.h.b16 %v236
    %v802 = vunpack.c.l.b16 %v237
    %v803 = vunpack.c.h.b16 %v237
    %v804 = vunpack.c.l.b16 %v238
    %v805 = vunpack.c.h.b16 %v238
    %v806 = vunpack.c.l.b16 %v239
    %v807 = vunpack.c.h.b16 %v239
    %v808 = vunpack.c.l.b16 %v240
    %v809 = vunpack.c.h.b16 %v240
    %v810 = vunpack.c.l.b16 %v241
    %v811 = vunpack.c.h.b16 %v241
    %v812 = vunpack.c.l.b16 %v242
    %v813 = vunpack.c.h.b16 %v242
    %v814 = vunpack.c.l.b16 %v243
    %v815 = vunpack.c.h.b16 %v243
    %v816 = vunpack.c.l.b16 %v244
    %v817 = vunpack.c.h.b16 %v244
    %v818 = vunpack.c.l.b16 %v245
    %v819 = vunpack.c.h.b16 %v245
    %v820 = vunpack.c.l.b16 %v246
    %v821 = vunpack.c.h.b16 %v246
    %v822 = vunpack.c.l.b16 %v247
    %v823 = vunpack.c.h.b16 %v247
    %v824 = vunpack.c.l.b16 %v248
    %v825 = vunpack.c.h.b16 %v248
    %v826 = vunpack.c.l.b16 %v249
    %v827 = vunpack.c.h.b16 %v249
    %v828 = vunpack.c.l.b16 %v250
    %v829 = vunpack.c.h.b16 %v250
    %v830 = vunpack.c.l.b16 %v251
    %v831 = vunpack.c.h.b16 %v251
    %v832 = vunpack.c.l.b16 %v252
    %v833 = vunpack.c.h.b16 %v252
    %v834 = vunpack.c.l.b16 %v253
    %v835 = vunpack.c.h.b16 %v253
    %v836 = vunpack.c.l.b16 %v254
    %v837 = vunpack.c.h.b16 %v254
    %v838 = vunpack.c.l.b16 %v255
    %v839 = vunpack.c.h.b16 %v255
    %v840 = vunpack.c.l.b16 %v256
    %v841 = vunpack.c.h.b16 %v256
    %v842 = vunpack.c.l.b16 %v257
    %v843 = vunpack.c.h.b16 %v257
    %v844 = vunpack.c.l.b16 %v258
    %v845 = vunpack.c.h.b16 %v258
    %v846 = vunpack.c.l.b16 %v259
    %v847 = vunpack.c.h.b16 %v259
    %v848 = vunpack.c.l.b16 %v260
    %v849 = vunpack.c.h.b16 %v260
    %v850 = vunpack.c.l.b16 %v261
    %v851 = vunpack.c.h.b16 %v261
    %v852 = vunpack.c.l.b16 %v262
    %v853 = vunpack.c.h.b16 %v262
    %v854 = vunpack.c.l.b16 %v263
    %v855 = vunpack.c.h.b16 %v263
    %v856 = vunpack.c.l.b16 %v264
    %v857 = vunpack.c.h.b16 %v264
    %v858 = vunpack.c.l.b16 %v265
    %v859 = vunpack.c.h.b16 %v265
    %v860 = vunpack.c.l.b16 %v266
    %v861 = vunpack.c.h.b16 %v266
    %v862 = vunpack.c.l.b16 %v267
    %v863 = vunpack.c.h.b16 %v267
    %v864 = vunpack.c.l.b16 %v268
    %v865 = vunpack.c.h.b16 %v268
    %v866 = vunpack.c.l.b16 %v269
    %v867 = vunpack.c.h.b16 %v269
    %v868 = vpack.c.b16 %v480, %v476
    %v869 = vpack.c.b16 %v481, %v477
    %v870 = vpack.c.b16 %v482, %v478
    %v871 = vpack.c.b16 %v483, %v479
    %v872 = vpack.c.b16 %v488, %v484
    %v873 = vpack.c.b16 %v489, %v485
    %v874 = vpack.c.b16 %v490, %v486
    %v875 = vpack.c.b16 %v491, %v487
    %v876 = vpack.c.b16 %v496, %v492
    %v877 = vpack.c.b16 %v497, %v493
    %v878 = vpack.c.b16 %v498, %v494
    %v879 = vpack.c.b16 %v499, %v495
    %v880 = vpack.c.b16 %v504, %v500
    %v881 = vpack.c.b16 %v505, %v501
    %v882 = vpack.c.b16 %v506, %v502
    %v883 = vpack.c.b16 %v507, %v503
    %v884 = vpack.c.b16 %v512, %v508
    %v885 = vpack.c.b16 %v513, %v509
    %v886 = vpack.c.b16 %v514, %v510
    %v887 = vpack.c.b16 %v515, %v511
    %v888 = vpack.c.b16 %v520, %v516
    %v889 = vpack.c.b16 %v521, %v517
    %v890 = vpack.c.b16 %v522, %v518
    %v891 = vpack.c.b16 %v523, %v519
    %v892 = vpack.c.b16 %v528, %v524
    %v893 = vpack.c.b16 %v529, %v525
    %v894 = vpack.c.b16 %v530, %v526
    %v895 = vpack.c.b16 %v531, %v527
    %v896 = vpack.c.b16 %v536, %v532
    %v897 = vpack.c.b16 %v537, %v533
    %v898 = vpack.c.b16 %v538, %v534
    %v899 = vpack.c.b16 %v539, %v535
    %v900 = vpack.c.b16 %v544, %v540
    %v901 = vpack.c.b16 %v545, %v541
    %v902 = vpack.c.b16 %v546, %v542
    %v903 = vpack.c.b16 %v547, %v543
    %v904 = vpack.c.b16 %v552, %v548
    %v905 = vpack.c.b16 %v553, %v549
    %v906 = vpack.c.b16 %v554, %v550
    %v907 = vpack.c.b16 %v555, %v551
    %v908 = vpack.c.b16 %v560, %v556
    %v909 = vpack.c.b16 %v561, %v557
    %v910 = vpack.c.b16 %v562, %v558
    %v911 = vpack.c.b16 %v563, %v559
    %v912 = vpack.c.b16 %v568, %v564
    %v913 = vpack.c.b16 %v569, %v565
    %v914 = vpack.c.b16 %v570, %v566
    %v915 = vpack.c.b16 %v571, %v567
    %v916 = vpack.c.b16 %v576, %v572
    %v917 = vpack.c.b16 %v577, %v573
    %v918 = vpack.c.b16 %v578, %v574
    %v919 = vpack.c.b16 %v579, %v575
    %v920 = vpack.c.b16 %v584, %v580
    %v921 = vpack.c.b16 %v585, %v581
    %v922 = vpack.c.b16 %v586, %v582
    %v923 = vpack.c.b16 %v587, %v583
    %v924 = vpack.c.b16 %v592, %v588
    %v925 = vpack.c.b16 %v593, %v589
    %v926 = vpack.c.b16 %v594, %v590
    %v927 = vpack.c.b16 %v595, %v591
    %v928 = vpack.c.b16 %v600, %v596
    %v929 = vpack.c.b16 %v601, %v597
    %v930 = vpack.c.b16 %v602, %v598
    %v931 = vpack.c.b16 %v603, %v599
    %v932 = vpack.c.b16 %v608, %v604
    %v933 = vpack.c.b16 %v609, %v605
    %v934 = vpack.c.b16 %v610, %v606
    %v935 = vpack.c.b16 %v611, %v607
    %v936 = vpack.c.b16 %v616, %v612
    %v937 = vpack.c.b16 %v617, %v613
    %v938 = vpack.c.b16 %v618, %v614
    %v939 = vpack.c.b16 %v619, %v615
    %v940 = vpack.c.b16 %v624, %v620
    %v941 = vpack.c.b16 %v625, %v621
    %v942 = vpack.c.b16 %v626, %v622
    %v943 = vpack.c.b16 %v627, %v623
    %v944 = vpack.c.b16 %v632, %v628
    %v945 = vpack.c.b16 %v633, %v629
    %v946 = vpack.c.b16 %v634, %v630
    %v947 = vpack.c.b16 %v635, %v631
    %v948 = vpack.c.b16 %v640, %v636
    %v949 = vpack.c.b16 %v641, %v637
    %v950 = vpack.c.b16 %v642, %v638
    %v951 = vpack.c.b16 %v643, %v639
    %v952 = vpack.c.b16 %v648, %v644
    %v953 = vpack.c.b16 %v649, %v645
    %v954 = vpack.c.b16 %v650, %v646
    %v955 = vpack.c.b16 %v651, %v647
    %v956 = vpack.c.b16 %v656, %v652
    %v957 = vpack.c.b16 %v657, %v653
    %v958 = vpack.c.b16 %v658, %v654
    %v959 = vpack.c.b16 %v659, %v655
    %v960 = vpack.c.b16 %v664, %v660
    %v961 = vpack.c.b16 %v665, %v661
    %v962 = vpack.c.b16 %v666, %v662
    %v963 = vpack.c.b16 %v667, %v663
    %v964 = vpack.c.b16 %v672, %v668
    %v965 = vpack.c.b16 %v673, %v669
    %v966 = vpack.c.b16 %v674, %v670
    %v967 = vpack.c.b16 %v675, %v671
    %v968 = vpack.c.b16 %v680, %v676
    %v969 = vpack.c.b16 %v681, %v677
    %v970 = vpack.c.b16 %v682, %v678
    %v971 = vpack.c.b16 %v683, %v679
    %v972 = vpack.c.b16 %v688, %v684
    %v973 = vpack.c.b16 %v689, %v685
    %v974 = vpack.c.b16 %v690, %v686
    %v975 = vpack.c.b16 %v691, %v687
    %v976 = vpack.c.b16 %v696, %v692
    %v977 = vpack.c.b16 %v697, %v693
    %v978 = vpack.c.b16 %v698, %v694
    %v979 = vpack.c.b16 %v699, %v695
    %v980 = vpack.c.b16 %v704, %v700
    %v981 = vpack.c.b16 %v705, %v701
    %v982 = vpack.c.b16 %v706, %v702
    %v983 = vpack.c.b16 %v707, %v703
    %v984 = vpack.c.b16 %v712, %v708
    %v985 = vpack.c.b16 %v713, %v709
    %v986 = vpack.c.b16 %v714, %v710
    %v987 = vpack.c.b16 %v715, %v711
    %v988 = vpack.c.b16 %v720, %v716
    %v989 = vpack.c.b16 %v721, %v717
    %v990 = vpack.c.b16 %v722, %v718
    %v991 = vpack.c.b16 %v723, %v719
    %v992 = vpack.c.b16 %v728, %v724
    %v993 = vpack.c.b16 %v729, %v725
    %v994 = vpack.c.b16 %v730, %v726
    %v995 = vpack.c.b16 %v731, %v727
    %v996 = vpack.c.b16 %v736, %v732
    %v997 = vpack.c.b16 %v737, %v733
    %v998 = vpack.c.b16 %v738, %v734
    %v999 = vpack.c.b16 %v739, %v735
    %v1000 = vpack.c.b16 %v744, %v740
    %v1001 = vpack.c.b16 %v745, %v741
    %v1002 = vpack.c.b16 %v746, %v742
    %v1003 = vpack.c.b16 %v747, %v743
    %v1004 = vpack.c.b16 %v752, %v748
    %v1005 = vpack.c.b16 %v753, %v749
    %v1006 = vpack.c.b16 %v754, %v750
    %v1007 = vpack.c.b16 %v755, %v751
    %v1008 = vpack.c.b16 %v760, %v756
    %v1009 = vpack.c.b16 %v761, %v757
    %v1010 = vpack.c.b16 %v762, %v758
    %v1011 = vpack.c.b16 %v763, %v759
    %v1012 = vpack.c.b16 %v768, %v764
    %v1013 = vpack.c.b16 %v769, %v765
    %v1014 = vpack.c.b16 %v770, %v766
    %v1015 = vpack.c.b16 %v771, %v767
    %v1016 = vpack.c.b16 %v776, %v772
    %v1017 = vpack.c.b16 %v777, %v773
    %v1018 = vpack.c.b16 %v778, %v774
    %v1019 = vpack.c.b16 %v779, %v775
    %v1020 = vpack.c.b16 %v784, %v780
    %v1021 = vpack.c.b16 %v785, %v781
    %v1022 = vpack.c.b16 %v786, %v782
    %v1023 = vpack.c.b16 %v787, %v783
    %v1024 = vpack.c.b16 %v792, %v788
    %v1025 = vpack.c.b16 %v793, %v789
    %v1026 = vpack.c.b16 %v794, %v790
    %v1027 = vpack.c.b16 %v795, %v791
    %v1028 = vpack.c.b16 %v800, %v796
    %v1029 = vpack.c.b16 %v801, %v797
    %v1030 = vpack.c.b16 %v802, %v798
    %v1031 = vpack.c.b16 %v803, %v799
    %v1032 = vpack.c.b16 %v808, %v804
    %v1033 = vpack.c.b16 %v809, %v805
    %v1034 = vpack.c.b16 %v810, %v806
    %v1035 = vpack.c.b16 %v811, %v807
    %v1036 = vpack.c.b16 %v816, %v812
    %v1037 = vpack.c.b16 %v817, %v813
    %v1038 = vpack.c.b16 %v818, %v814
    %v1039 = vpack.c.b16 %v819, %v815
    %v1040 = vpack.c.b16 %v824, %v820
    %v1041 = vpack.c.b16 %v825, %v821
    %v1042 = vpack.c.b16 %v826, %v822
    %v1043 = vpack.c.b16 %v827, %v823
    %v1044 = vpack.c.b16 %v832, %v828
    %v1045 = vpack.c.b16 %v833, %v829
    %v1046 = vpack.c.b16 %v834, %v830
    %v1047 = vpack.c.b16 %v835, %v831
    %v1048 = vpack.c.b16 %v840, %v836
    %v1049 = vpack.c.b16 %v841, %v837
    %v1050 = vpack.c.b16 %v842, %v838
    %v1051 = vpack.c.b16 %v843, %v839
    %v1052 = vpack.c.b16 %v848, %v844
    %v1053 = vpack.c.b16 %v849, %v845
    %v1054 = vpack.c.b16 %v850, %v846
    %v1055 = vpack.c.b16 %v851, %v847
    %v1056 = vpack.c.b16 %v856, %v852
    %v1057 = vpack.c.b16 %v857, %v853
    %v1058 = vpack.c.b16 %v858, %v854
    %v1059 = vpack.c.b16 %v859, %v855
    %v1060 = vpack.c.b16 %v864, %v860
    %v1061 = vpack.c.b16 %v865, %v861
    %v1062 = vpack.c.b16 %v866, %v862
    %v1063 = vpack.c.b16 %v867, %v863
    %vm1260 = vcmask 130048
    %v1262 = vsel %vm1260, %v73, 0
    %1264 = vmatpush.bf16.msra.mxu0 %v896
    %1265 = vmatpush.bf16.msra.mxu0 %v892
    %1266 = vmatpush.bf16.msra.mxu0 %v888
    %1267 = vmatpush.bf16.msra.mxu0 %v884
    %1268 = vmatpush.bf16.msra.mxu0 %v880
    %1269 = vmatpush.bf16.msra.mxu0 %v876
    %1270 = vmatpush.bf16.msra.mxu0 %v872
    %1271 = vmatpush.bf16.msra.mxu0 %v868
    %1272 = vmatmul.bf16.gmra.mxu0 %v67
    %v1273 = vpop.f32.mrf.mxu0
    %v1274 = vadd.f32 %v272, %v1273
    %v1275 = vpop.f32.mrf.mxu0
    %1276 = vdwg.mxu0
    %1277 = vmatpush.bf16.msra.mxu0 %v928
    %1278 = vmatpush.bf16.msra.mxu0 %v924
    %1279 = vmatpush.bf16.msra.mxu0 %v920
    %1280 = vmatpush.bf16.msra.mxu0 %v916
    %1281 = vmatpush.bf16.msra.mxu0 %v912
    %1282 = vmatpush.bf16.msra.mxu0 %v908
    %1283 = vmatpush.bf16.msra.mxu0 %v904
    %1284 = vmatpush.bf16.msra.mxu0 %v900
    %1285 = vmatmul.bf16.gmra.mxu0 %v68
    %v1286 = vpop.f32.mrf.mxu0
    %v1287 = vadd.f32 %v1274, %v1286
    %v1288 = vpop.f32.mrf.mxu0
    %1289 = vdwg.mxu0
    %1290 = vmatpush.bf16.msra.mxu0 %v960
    %1291 = vmatpush.bf16.msra.mxu0 %v956
    %1292 = vmatpush.bf16.msra.mxu0 %v952
    %1293 = vmatpush.bf16.msra.mxu0 %v948
    %1294 = vmatpush.bf16.msra.mxu0 %v944
    %1295 = vmatpush.bf16.msra.mxu0 %v940
    %1296 = vmatpush.bf16.msra.mxu0 %v936
    %1297 = vmatpush.bf16.msra.mxu0 %v932
    %1298 = vmatmul.bf16.gmra.mxu0 %v69
    %v1299 = vpop.f32.mrf.mxu0
    %v1300 = vadd.f32 %v1287, %v1299
    %v1301 = vpop.f32.mrf.mxu0
    %1302 = vdwg.mxu0
    %1303 = vmatpush.bf16.msra.mxu0 %v992
    %1304 = vmatpush.bf16.msra.mxu0 %v988
    %1305 = vmatpush.bf16.msra.mxu0 %v984
    %1306 = vmatpush.bf16.msra.mxu0 %v980
    %1307 = vmatpush.bf16.msra.mxu0 %v976
    %1308 = vmatpush.bf16.msra.mxu0 %v972
    %1309 = vmatpush.bf16.msra.mxu0 %v968
    %1310 = vmatpush.bf16.msra.mxu0 %v964
    %1311 = vmatmul.bf16.gmra.mxu0 %v70
    %v1312 = vpop.f32.mrf.mxu0
    %v1313 = vadd.f32 %v1300, %v1312
    %v1314 = vpop.f32.mrf.mxu0
    %1315 = vdwg.mxu0
    %1316 = vmatpush.bf16.msra.mxu0 %v1024
    %1317 = vmatpush.bf16.msra.mxu0 %v1020
    %1318 = vmatpush.bf16.msra.mxu0 %v1016
    %1319 = vmatpush.bf16.msra.mxu0 %v1012
    %1320 = vmatpush.bf16.msra.mxu0 %v1008
    %1321 = vmatpush.bf16.msra.mxu0 %v1004
    %1322 = vmatpush.bf16.msra.mxu0 %v1000
    %1323 = vmatpush.bf16.msra.mxu0 %v996
    %1324 = vmatmul.bf16.gmra.mxu0 %v71
    %v1325 = vpop.f32.mrf.mxu0
    %v1326 = vadd.f32 %v1313, %v1325
    %v1327 = vpop.f32.mrf.mxu0
    %1328 = vdwg.mxu0
    %1329 = vmatpush.bf16.msra.mxu0 %v1056
    %1330 = vmatpush.bf16.msra.mxu0 %v1052
    %1331 = vmatpush.bf16.msra.mxu0 %v1048
    %1332 = vmatpush.bf16.msra.mxu0 %v1044
    %1333 = vmatpush.bf16.msra.mxu0 %v1040
    %1334 = vmatpush.bf16.msra.mxu0 %v1036
    %1335 = vmatpush.bf16.msra.mxu0 %v1032
    %1336 = vmatpush.bf16.msra.mxu0 %v1028
    %1337 = vmatmul.bf16.gmra.mxu0 %v72
    %v1338 = vpop.f32.mrf.mxu0
    %v1339 = vadd.f32 %v1326, %v1338
    %v1340 = vpop.f32.mrf.mxu0
    %1341 = vdwg.mxu0
    %1342 = vmatpush.bf16.msra.mxu0 0
    %1343 = vmatpush.bf16.msra.mxu0 0
    %1344 = vmatpush.bf16.msra.mxu0 0
    %1345 = vmatpush.bf16.msra.mxu0 0
    %1346 = vmatpush.bf16.msra.mxu0 0
    %1347 = vmatpush.bf16.msra.mxu0 0
    %1348 = vmatpush.bf16.msra.mxu0 0
    %1349 = vmatpush.bf16.msra.mxu0 %v1060
    %1350 = vmatmul.bf16.gmra.mxu0 %v1262
    %v1351 = vpop.f32.mrf.mxu0
    %v1352 = vadd.f32 %v1339, %v1351
    %v1353 = vpop.f32.mrf.mxu0
    %1354 = vdwg.mxu0
    %1355 = vmatpush.bf16.msra.mxu0 %v897
    %1356 = vmatpush.bf16.msra.mxu0 %v893
    %1357 = vmatpush.bf16.msra.mxu0 %v889
    %1358 = vmatpush.bf16.msra.mxu0 %v885
    %1359 = vmatpush.bf16.msra.mxu0 %v881
    %1360 = vmatpush.bf16.msra.mxu0 %v877
    %1361 = vmatpush.bf16.msra.mxu0 %v873
    %1362 = vmatpush.bf16.msra.mxu0 %v869
    %1363 = vmatmul.bf16.gmra.mxu0 %v67
    %v1364 = vpop.f32.mrf.mxu0
    %v1365 = vadd.f32 %v273, %v1364
    %v1366 = vpop.f32.mrf.mxu0
    %1367 = vdwg.mxu0
    %1368 = vmatpush.bf16.msra.mxu0 %v929
    %1369 = vmatpush.bf16.msra.mxu0 %v925
    %1370 = vmatpush.bf16.msra.mxu0 %v921
    %1371 = vmatpush.bf16.msra.mxu0 %v917
    %1372 = vmatpush.bf16.msra.mxu0 %v913
    %1373 = vmatpush.bf16.msra.mxu0 %v909
    %1374 = vmatpush.bf16.msra.mxu0 %v905
    %1375 = vmatpush.bf16.msra.mxu0 %v901
    %1376 = vmatmul.bf16.gmra.mxu0 %v68
    %v1377 = vpop.f32.mrf.mxu0
    %v1378 = vadd.f32 %v1365, %v1377
    %v1379 = vpop.f32.mrf.mxu0
    %1380 = vdwg.mxu0
    %1381 = vmatpush.bf16.msra.mxu0 %v961
    %1382 = vmatpush.bf16.msra.mxu0 %v957
    %1383 = vmatpush.bf16.msra.mxu0 %v953
    %1384 = vmatpush.bf16.msra.mxu0 %v949
    %1385 = vmatpush.bf16.msra.mxu0 %v945
    %1386 = vmatpush.bf16.msra.mxu0 %v941
    %1387 = vmatpush.bf16.msra.mxu0 %v937
    %1388 = vmatpush.bf16.msra.mxu0 %v933
    %1389 = vmatmul.bf16.gmra.mxu0 %v69
    %v1390 = vpop.f32.mrf.mxu0
    %v1391 = vadd.f32 %v1378, %v1390
    %v1392 = vpop.f32.mrf.mxu0
    %1393 = vdwg.mxu0
    %1394 = vmatpush.bf16.msra.mxu0 %v993
    %1395 = vmatpush.bf16.msra.mxu0 %v989
    %1396 = vmatpush.bf16.msra.mxu0 %v985
    %1397 = vmatpush.bf16.msra.mxu0 %v981
    %1398 = vmatpush.bf16.msra.mxu0 %v977
    %1399 = vmatpush.bf16.msra.mxu0 %v973
    %1400 = vmatpush.bf16.msra.mxu0 %v969
    %1401 = vmatpush.bf16.msra.mxu0 %v965
    %1402 = vmatmul.bf16.gmra.mxu0 %v70
    %v1403 = vpop.f32.mrf.mxu0
    %v1404 = vadd.f32 %v1391, %v1403
    %v1405 = vpop.f32.mrf.mxu0
    %1406 = vdwg.mxu0
    %1407 = vmatpush.bf16.msra.mxu0 %v1025
    %1408 = vmatpush.bf16.msra.mxu0 %v1021
    %1409 = vmatpush.bf16.msra.mxu0 %v1017
    %1410 = vmatpush.bf16.msra.mxu0 %v1013
    %1411 = vmatpush.bf16.msra.mxu0 %v1009
    %1412 = vmatpush.bf16.msra.mxu0 %v1005
    %1413 = vmatpush.bf16.msra.mxu0 %v1001
    %1414 = vmatpush.bf16.msra.mxu0 %v997
    %1415 = vmatmul.bf16.gmra.mxu0 %v71
    %v1416 = vpop.f32.mrf.mxu0
    %v1417 = vadd.f32 %v1404, %v1416
    %v1418 = vpop.f32.mrf.mxu0
    %1419 = vdwg.mxu0
    %1420 = vmatpush.bf16.msra.mxu0 %v1057
    %1421 = vmatpush.bf16.msra.mxu0 %v1053
    %1422 = vmatpush.bf16.msra.mxu0 %v1049
    %1423 = vmatpush.bf16.msra.mxu0 %v1045
    %1424 = vmatpush.bf16.msra.mxu0 %v1041
    %1425 = vmatpush.bf16.msra.mxu0 %v1037
    %1426 = vmatpush.bf16.msra.mxu0 %v1033
    %1427 = vmatpush.bf16.msra.mxu0 %v1029
    %1428 = vmatmul.bf16.gmra.mxu0 %v72
    %v1429 = vpop.f32.mrf.mxu0
    %v1430 = vadd.f32 %v1417, %v1429
    %v1431 = vpop.f32.mrf.mxu0
    %1432 = vdwg.mxu0
    %1433 = vmatpush.bf16.msra.mxu0 0
    %1434 = vmatpush.bf16.msra.mxu0 0
    %1435 = vmatpush.bf16.msra.mxu0 0
    %1436 = vmatpush.bf16.msra.mxu0 0
    %1437 = vmatpush.bf16.msra.mxu0 0
    %1438 = vmatpush.bf16.msra.mxu0 0
    %1439 = vmatpush.bf16.msra.mxu0 0
    %1440 = vmatpush.bf16.msra.mxu0 %v1061
    %1441 = vmatmul.bf16.gmra.mxu0 %v1262
    %v1442 = vpop.f32.mrf.mxu0
    %v1443 = vadd.f32 %v1430, %v1442
    %v1444 = vpop.f32.mrf.mxu0
    %1445 = vdwg.mxu0
    %1446 = vmatpush.bf16.msra.mxu0 %v898
    %1447 = vmatpush.bf16.msra.mxu0 %v894
    %1448 = vmatpush.bf16.msra.mxu0 %v890
    %1449 = vmatpush.bf16.msra.mxu0 %v886
    %1450 = vmatpush.bf16.msra.mxu0 %v882
    %1451 = vmatpush.bf16.msra.mxu0 %v878
    %1452 = vmatpush.bf16.msra.mxu0 %v874
    %1453 = vmatpush.bf16.msra.mxu0 %v870
    %1454 = vmatmul.bf16.gmra.mxu0 %v67
    %v1455 = vpop.f32.mrf.mxu0
    %v1456 = vadd.f32 %v274, %v1455
    %v1457 = vpop.f32.mrf.mxu0
    %1458 = vdwg.mxu0
    %1459 = vmatpush.bf16.msra.mxu0 %v930
    %1460 = vmatpush.bf16.msra.mxu0 %v926
    %1461 = vmatpush.bf16.msra.mxu0 %v922
    %1462 = vmatpush.bf16.msra.mxu0 %v918
    %1463 = vmatpush.bf16.msra.mxu0 %v914
    %1464 = vmatpush.bf16.msra.mxu0 %v910
    %1465 = vmatpush.bf16.msra.mxu0 %v906
    %1466 = vmatpush.bf16.msra.mxu0 %v902
    %1467 = vmatmul.bf16.gmra.mxu0 %v68
    %v1468 = vpop.f32.mrf.mxu0
    %v1469 = vadd.f32 %v1456, %v1468
    %v1470 = vpop.f32.mrf.mxu0
    %1471 = vdwg.mxu0
    %1472 = vmatpush.bf16.msra.mxu0 %v962
    %1473 = vmatpush.bf16.msra.mxu0 %v958
    %1474 = vmatpush.bf16.msra.mxu0 %v954
    %1475 = vmatpush.bf16.msra.mxu0 %v950
    %1476 = vmatpush.bf16.msra.mxu0 %v946
    %1477 = vmatpush.bf16.msra.mxu0 %v942
    %1478 = vmatpush.bf16.msra.mxu0 %v938
    %1479 = vmatpush.bf16.msra.mxu0 %v934
    %1480 = vmatmul.bf16.gmra.mxu0 %v69
    %v1481 = vpop.f32.mrf.mxu0
    %v1482 = vadd.f32 %v1469, %v1481
    %v1483 = vpop.f32.mrf.mxu0
    %1484 = vdwg.mxu0
    %1485 = vmatpush.bf16.msra.mxu0 %v994
    %1486 = vmatpush.bf16.msra.mxu0 %v990
    %1487 = vmatpush.bf16.msra.mxu0 %v986
    %1488 = vmatpush.bf16.msra.mxu0 %v982
    %1489 = vmatpush.bf16.msra.mxu0 %v978
    %1490 = vmatpush.bf16.msra.mxu0 %v974
    %1491 = vmatpush.bf16.msra.mxu0 %v970
    %1492 = vmatpush.bf16.msra.mxu0 %v966
    %1493 = vmatmul.bf16.gmra.mxu0 %v70
    %v1494 = vpop.f32.mrf.mxu0
    %v1495 = vadd.f32 %v1482, %v1494
    %v1496 = vpop.f32.mrf.mxu0
    %1497 = vdwg.mxu0
    %1498 = vmatpush.bf16.msra.mxu0 %v1026
    %1499 = vmatpush.bf16.msra.mxu0 %v1022
    %1500 = vmatpush.bf16.msra.mxu0 %v1018
    %1501 = vmatpush.bf16.msra.mxu0 %v1014
    %1502 = vmatpush.bf16.msra.mxu0 %v1010
    %1503 = vmatpush.bf16.msra.mxu0 %v1006
    %1504 = vmatpush.bf16.msra.mxu0 %v1002
    %1505 = vmatpush.bf16.msra.mxu0 %v998
    %1506 = vmatmul.bf16.gmra.mxu0 %v71
    %v1507 = vpop.f32.mrf.mxu0
    %v1508 = vadd.f32 %v1495, %v1507
    %v1509 = vpop.f32.mrf.mxu0
    %1510 = vdwg.mxu0
    %1511 = vmatpush.bf16.msra.mxu0 %v1058
    %1512 = vmatpush.bf16.msra.mxu0 %v1054
    %1513 = vmatpush.bf16.msra.mxu0 %v1050
    %1514 = vmatpush.bf16.msra.mxu0 %v1046
    %1515 = vmatpush.bf16.msra.mxu0 %v1042
    %1516 = vmatpush.bf16.msra.mxu0 %v1038
    %1517 = vmatpush.bf16.msra.mxu0 %v1034
    %1518 = vmatpush.bf16.msra.mxu0 %v1030
    %1519 = vmatmul.bf16.gmra.mxu0 %v72
    %v1520 = vpop.f32.mrf.mxu0
    %v1521 = vadd.f32 %v1508, %v1520
    %v1522 = vpop.f32.mrf.mxu0
    %1523 = vdwg.mxu0
    %1524 = vmatpush.bf16.msra.mxu0 0
    %1525 = vmatpush.bf16.msra.mxu0 0
    %1526 = vmatpush.bf16.msra.mxu0 0
    %1527 = vmatpush.bf16.msra.mxu0 0
    %1528 = vmatpush.bf16.msra.mxu0 0
    %1529 = vmatpush.bf16.msra.mxu0 0
    %1530 = vmatpush.bf16.msra.mxu0 0
    %1531 = vmatpush.bf16.msra.mxu0 %v1062
    %1532 = vmatmul.bf16.gmra.mxu0 %v1262
    %v1533 = vpop.f32.mrf.mxu0
    %v1534 = vadd.f32 %v1521, %v1533
    %v1535 = vpop.f32.mrf.mxu0
    %1536 = vdwg.mxu0
    %1537 = vmatpush.bf16.msra.mxu0 %v899
    %1538 = vmatpush.bf16.msra.mxu0 %v895
    %1539 = vmatpush.bf16.msra.mxu0 %v891
    %1540 = vmatpush.bf16.msra.mxu0 %v887
    %1541 = vmatpush.bf16.msra.mxu0 %v883
    %1542 = vmatpush.bf16.msra.mxu0 %v879
    %1543 = vmatpush.bf16.msra.mxu0 %v875
    %1544 = vmatpush.bf16.msra.mxu0 %v871
    %1545 = vmatmul.bf16.gmra.mxu0 %v67
    %v1546 = vpop.f32.mrf.mxu0
    %v1547 = vadd.f32 %v275, %v1546
    %v1548 = vpop.f32.mrf.mxu0
    %1549 = vdwg.mxu0
    %1550 = vmatpush.bf16.msra.mxu0 %v931
    %1551 = vmatpush.bf16.msra.mxu0 %v927
    %1552 = vmatpush.bf16.msra.mxu0 %v923
    %1553 = vmatpush.bf16.msra.mxu0 %v919
    %1554 = vmatpush.bf16.msra.mxu0 %v915
    %1555 = vmatpush.bf16.msra.mxu0 %v911
    %1556 = vmatpush.bf16.msra.mxu0 %v907
    %1557 = vmatpush.bf16.msra.mxu0 %v903
    %1558 = vmatmul.bf16.gmra.mxu0 %v68
    %v1559 = vpop.f32.mrf.mxu0
    %v1560 = vadd.f32 %v1547, %v1559
    %v1561 = vpop.f32.mrf.mxu0
    %1562 = vdwg.mxu0
    %1563 = vmatpush.bf16.msra.mxu0 %v963
    %1564 = vmatpush.bf16.msra.mxu0 %v959
    %1565 = vmatpush.bf16.msra.mxu0 %v955
    %1566 = vmatpush.bf16.msra.mxu0 %v951
    %1567 = vmatpush.bf16.msra.mxu0 %v947
    %1568 = vmatpush.bf16.msra.mxu0 %v943
    %1569 = vmatpush.bf16.msra.mxu0 %v939
    %1570 = vmatpush.bf16.msra.mxu0 %v935
    %1571 = vmatmul.bf16.gmra.mxu0 %v69
    %v1572 = vpop.f32.mrf.mxu0
    %v1573 = vadd.f32 %v1560, %v1572
    %v1574 = vpop.f32.mrf.mxu0
    %1575 = vdwg.mxu0
    %1576 = vmatpush.bf16.msra.mxu0 %v995
    %1577 = vmatpush.bf16.msra.mxu0 %v991
    %1578 = vmatpush.bf16.msra.mxu0 %v987
    %1579 = vmatpush.bf16.msra.mxu0 %v983
    %1580 = vmatpush.bf16.msra.mxu0 %v979
    %1581 = vmatpush.bf16.msra.mxu0 %v975
    %1582 = vmatpush.bf16.msra.mxu0 %v971
    %1583 = vmatpush.bf16.msra.mxu0 %v967
    %1584 = vmatmul.bf16.gmra.mxu0 %v70
    %v1585 = vpop.f32.mrf.mxu0
    %v1586 = vadd.f32 %v1573, %v1585
    %v1587 = vpop.f32.mrf.mxu0
    %1588 = vdwg.mxu0
    %1589 = vmatpush.bf16.msra.mxu0 %v1027
    %1590 = vmatpush.bf16.msra.mxu0 %v1023
    %1591 = vmatpush.bf16.msra.mxu0 %v1019
    %1592 = vmatpush.bf16.msra.mxu0 %v1015
    %1593 = vmatpush.bf16.msra.mxu0 %v1011
    %1594 = vmatpush.bf16.msra.mxu0 %v1007
    %1595 = vmatpush.bf16.msra.mxu0 %v1003
    %1596 = vmatpush.bf16.msra.mxu0 %v999
    %1597 = vmatmul.bf16.gmra.mxu0 %v71
    %v1598 = vpop.f32.mrf.mxu0
    %v1599 = vadd.f32 %v1586, %v1598
    %v1600 = vpop.f32.mrf.mxu0
    %1601 = vdwg.mxu0
    %1602 = vmatpush.bf16.msra.mxu0 %v1059
    %1603 = vmatpush.bf16.msra.mxu0 %v1055
    %1604 = vmatpush.bf16.msra.mxu0 %v1051
    %1605 = vmatpush.bf16.msra.mxu0 %v1047
    %1606 = vmatpush.bf16.msra.mxu0 %v1043
    %1607 = vmatpush.bf16.msra.mxu0 %v1039
    %1608 = vmatpush.bf16.msra.mxu0 %v1035
    %1609 = vmatpush.bf16.msra.mxu0 %v1031
    %1610 = vmatmul.bf16.gmra.mxu0 %v72
    %v1611 = vpop.f32.mrf.mxu0
    %v1612 = vadd.f32 %v1599, %v1611
    %v1613 = vpop.f32.mrf.mxu0
    %1614 = vdwg.mxu0
    %1615 = vmatpush.bf16.msra.mxu0 0
    %1616 = vmatpush.bf16.msra.mxu0 0
    %1617 = vmatpush.bf16.msra.mxu0 0
    %1618 = vmatpush.bf16.msra.mxu0 0
    %1619 = vmatpush.bf16.msra.mxu0 0
    %1620 = vmatpush.bf16.msra.mxu0 0
    %1621 = vmatpush.bf16.msra.mxu0 0
    %1622 = vmatpush.bf16.msra.mxu0 %v1063
    %1623 = vmatmul.bf16.gmra.mxu0 %v1262
    %v1624 = vpop.f32.mrf.mxu0
    %v1625 = vadd.f32 %v1612, %v1624
    %v1626 = vpop.f32.mrf.mxu0
    %1627 = vdwg.mxu0
    %v1628 = vmax.f32 %v1352, 0.0
    %v1629 = vmax.f32 %v1443, 0.0
    %v1630 = vmax.f32 %v1534, 0.0
    %v1631 = vmax.f32 %v1625, 0.0
    %v1632 = vpack.c.bf16 %v1628, %v1628
    %v1633 = vpack.c.bf16 %v1629, %v1629
    %v1634 = vpack.c.bf16 %v1630, %v1630
    %v1635 = vpack.c.bf16 %v1631, %v1631
    %v1636 = vld [vmem:[#allocation5] sm:$0xff]
    %v1637 = vld [vmem:[#allocation5 + $0x8] sm:$0xff]
    %v1638 = vld [vmem:[#allocation5 + $0x10] sm:$0xff]
    %v1639 = vld [vmem:[#allocation5 + $0x18] sm:$0xff]
    %v1640 = vld [vmem:[#allocation5 + $0x20] sm:$0xff]
    %v1641 = vld [vmem:[#allocation5 + $0x28] sm:$0xff]
    %v1642 = vld [vmem:[#allocation5 + $0x30] sm:$0xff]
    %v1643 = vld [vmem:[#allocation5 + $0x38] sm:$0xff]
    %v1644 = vld [vmem:[#allocation5 + $0x40] sm:$0xff]
    %v1645 = vld [vmem:[#allocation5 + $0x48] sm:$0xff]
    %v1646 = vld [vmem:[#allocation5 + $0x50] sm:$0xff]
    %v1647 = vld [vmem:[#allocation5 + $0x58] sm:$0xff]
    %v1648 = vld [vmem:[#allocation5 + $0x60] sm:$0xff]
    %v1649 = vld [vmem:[#allocation5 + $0x68] sm:$0xff]
    %v1650 = vld [vmem:[#allocation5 + $0x70] sm:$0xff]
    %v1651 = vld [vmem:[#allocation5 + $0x78] sm:$0xff]
    %v1652 = vld [vmem:[#allocation5 + $0x80] sm:$0xff]
    %v1653 = vld [vmem:[#allocation5 + $0x88] sm:$0xff]
    %v1654 = vld [vmem:[#allocation5 + $0x90] sm:$0xff]
    %v1655 = vld [vmem:[#allocation5 + $0x98] sm:$0xff]
    %v1656 = vld [vmem:[#allocation5 + $0xa0] sm:$0xff]
    %v1657 = vld [vmem:[#allocation5 + $0xa8] sm:$0xff]
    %v1658 = vld [vmem:[#allocation5 + $0xb0] sm:$0xff]
    %v1659 = vld [vmem:[#allocation5 + $0xb8] sm:$0xff]
    %v1660 = vld [vmem:[#allocation5 + $0xc0] sm:$0xff]
    %v1661 = vld [vmem:[#allocation5 + $0xc8] sm:$0xff]
    %v1662 = vld [vmem:[#allocation5 + $0xd0] sm:$0xff]
    %v1663 = vld [vmem:[#allocation5 + $0xd8] sm:$0xff]
    %v1664 = vld [vmem:[#allocation5 + $0xe0] sm:$0xff]
    %v1665 = vld [vmem:[#allocation5 + $0xe8] sm:$0xff]
    %v1666 = vld [vmem:[#allocation5 + $0xf0] sm:$0xff]
    %v1667 = vld [vmem:[#allocation5 + $0xf8] sm:$0xff]
    %v1668 = vld [vmem:[#allocation5 + $0x100] sm:$0xff]
    %v1669 = vld [vmem:[#allocation5 + $0x108] sm:$0xff]
    %v1670 = vld [vmem:[#allocation5 + $0x110] sm:$0xff]
    %v1671 = vld [vmem:[#allocation5 + $0x118] sm:$0xff]
    %v1672 = vld [vmem:[#allocation5 + $0x120] sm:$0xff]
    %v1673 = vld [vmem:[#allocation5 + $0x128] sm:$0xff]
    %v1674 = vld [vmem:[#allocation5 + $0x130] sm:$0xff]
    %v1675 = vld [vmem:[#allocation5 + $0x138] sm:$0xff]
    %v1676 = vld [vmem:[#allocation5 + $0x140] sm:$0xff]
    %v1677 = vld [vmem:[#allocation5 + $0x148] sm:$0xff]
    %v1678 = vld [vmem:[#allocation5 + $0x150] sm:$0xff]
    %v1679 = vld [vmem:[#allocation5 + $0x158] sm:$0xff]
    %v1680 = vld [vmem:[#allocation5 + $0x160] sm:$0xff]
    %v1681 = vld [vmem:[#allocation5 + $0x168] sm:$0xff]
    %v1682 = vld [vmem:[#allocation5 + $0x170] sm:$0xff]
    %v1683 = vld [vmem:[#allocation5 + $0x178] sm:$0xff]
    %v1684 = vld [vmem:[#allocation5 + $0x180] sm:$0xff]
    %v1685 = vld [vmem:[#allocation5 + $0x188] sm:$0xff]
    %v1686 = vld [vmem:[#allocation5 + $0x190] sm:$0xff]
    %v1687 = vld [vmem:[#allocation5 + $0x198] sm:$0xff]
    %v1688 = vld [vmem:[#allocation5 + $0x1a0] sm:$0xff]
    %v1689 = vld [vmem:[#allocation5 + $0x1a8] sm:$0xff]
    %v1690 = vld [vmem:[#allocation5 + $0x1b0] sm:$0xff]
    %v1691 = vld [vmem:[#allocation5 + $0x1b8] sm:$0xff]
    %v1692 = vld [vmem:[#allocation5 + $0x1c0] sm:$0xff]
    %v1693 = vld [vmem:[#allocation5 + $0x1c8] sm:$0xff]
    %v1694 = vld [vmem:[#allocation5 + $0x1d0] sm:$0xff]
    %v1695 = vld [vmem:[#allocation5 + $0x1d8] sm:$0xff]
    %v1696 = vld [vmem:[#allocation5 + $0x1e0] sm:$0xff]
    %v1697 = vld [vmem:[#allocation5 + $0x1e8] sm:$0xff]
    %v1698 = vld [vmem:[#allocation5 + $0x1f0] sm:$0xff]
    %v1699 = vld [vmem:[#allocation5 + $0x1f8] sm:$0xff]
    %v1700 = vld [vmem:[#allocation5 + $0x200] sm:$0xff]
    %v1701 = vld [vmem:[#allocation5 + $0x208] sm:$0xff]
    %v1702 = vld [vmem:[#allocation5 + $0x210] sm:$0xff]
    %v1703 = vld [vmem:[#allocation5 + $0x218] sm:$0xff]
    %v1704 = vld [vmem:[#allocation5 + $0x220] sm:$0xff]
    %v1705 = vld [vmem:[#allocation5 + $0x228] sm:$0xff]
    %v1706 = vld [vmem:[#allocation5 + $0x230] sm:$0xff]
    %v1707 = vld [vmem:[#allocation5 + $0x238] sm:$0xff]
    %v1708 = vld [vmem:[#allocation5 + $0x240] sm:$0xff]
    %v1709 = vld [vmem:[#allocation5 + $0x248] sm:$0xff]
    %v1710 = vld [vmem:[#allocation5 + $0x250] sm:$0xff]
    %v1711 = vld [vmem:[#allocation5 + $0x258] sm:$0xff]
    %v1712 = vld [vmem:[#allocation5 + $0x260] sm:$0xff]
    %v1713 = vld [vmem:[#allocation5 + $0x268] sm:$0xff]
    %v1714 = vld [vmem:[#allocation5 + $0x270] sm:$0xff]
    %v1715 = vld [vmem:[#allocation5 + $0x278] sm:$0xff]
    %v1716 = vld [vmem:[#allocation5 + $0x280] sm:$0xff]
    %v1717 = vld [vmem:[#allocation5 + $0x288] sm:$0xff]
    %v1718 = vld [vmem:[#allocation5 + $0x290] sm:$0xff]
    %v1719 = vld [vmem:[#allocation5 + $0x298] sm:$0xff]
    %v1720 = vld [vmem:[#allocation5 + $0x2a0] sm:$0xff]
    %v1721 = vld [vmem:[#allocation5 + $0x2a8] sm:$0xff]
    %v1722 = vld [vmem:[#allocation5 + $0x2b0] sm:$0xff]
    %v1723 = vld [vmem:[#allocation5 + $0x2b8] sm:$0xff]
    %v1724 = vld [vmem:[#allocation5 + $0x2c0] sm:$0xff]
    %v1725 = vld [vmem:[#allocation5 + $0x2c8] sm:$0xff]
    %v1726 = vld [vmem:[#allocation5 + $0x2d0] sm:$0xff]
    %v1727 = vld [vmem:[#allocation5 + $0x2d8] sm:$0xff]
    %v1728 = vld [vmem:[#allocation5 + $0x2e0] sm:$0xff]
    %v1729 = vld [vmem:[#allocation5 + $0x2e8] sm:$0xff]
    %v1730 = vld [vmem:[#allocation5 + $0x2f0] sm:$0xff]
    %v1731 = vld [vmem:[#allocation5 + $0x2f8] sm:$0xff]
    %v1732 = vld [vmem:[#allocation5 + $0x300] sm:$0xff]
    %v1733 = vld [vmem:[#allocation5 + $0x308] sm:$0xff]
    %v1734 = vld [vmem:[#allocation5 + $0x310] sm:$0xff]
    %v1735 = vld [vmem:[#allocation5 + $0x318] sm:$0xff]
    %v1736 = vld [vmem:[#allocation5 + $0x320] sm:$0xff]
    %v1737 = vld [vmem:[#allocation5 + $0x328] sm:$0xff]
    %v1738 = vld [vmem:[#allocation5 + $0x330] sm:$0xff]
    %v1739 = vld [vmem:[#allocation5 + $0x338] sm:$0xff]
    %v1740 = vld [vmem:[#allocation5 + $0x340] sm:$0xff]
    %v1741 = vld [vmem:[#allocation5 + $0x348] sm:$0xff]
    %v1742 = vld [vmem:[#allocation5 + $0x350] sm:$0xff]
    %v1743 = vld [vmem:[#allocation5 + $0x358] sm:$0xff]
    %v1744 = vld [vmem:[#allocation5 + $0x360] sm:$0xff]
    %v1745 = vld [vmem:[#allocation5 + $0x368] sm:$0xff]
    %v1746 = vld [vmem:[#allocation5 + $0x370] sm:$0xff]
    %v1747 = vld [vmem:[#allocation5 + $0x378] sm:$0xff]
    %v1748 = vld [vmem:[#allocation5 + $0x380] sm:$0xff]
    %v1749 = vld [vmem:[#allocation5 + $0x388] sm:$0xff]
    %v1750 = vld [vmem:[#allocation5 + $0x390] sm:$0xff]
    %v1751 = vld [vmem:[#allocation5 + $0x398] sm:$0xff]
    %v1752 = vld [vmem:[#allocation5 + $0x3a0] sm:$0xff]
    %v1753 = vld [vmem:[#allocation5 + $0x3a8] sm:$0xff]
    %v1754 = vld [vmem:[#allocation5 + $0x3b0] sm:$0xff]
    %v1755 = vld [vmem:[#allocation5 + $0x3b8] sm:$0xff]
    %v1756 = vld [vmem:[#allocation5 + $0x3c0] sm:$0xff]
    %v1757 = vld [vmem:[#allocation5 + $0x3c8] sm:$0xff]
    %v1758 = vld [vmem:[#allocation5 + $0x3d0] sm:$0xff]
    %v1759 = vld [vmem:[#allocation5 + $0x3d8] sm:$0xff]
    %v1760 = vld [vmem:[#allocation5 + $0x3e0] sm:$0xff]
    %v1761 = vld [vmem:[#allocation5 + $0x3e8] sm:$0xff]
    %v1762 = vld [vmem:[#allocation5 + $0x3f0] sm:$0xff]
    %v1763 = vld [vmem:[#allocation5 + $0x3f8] sm:$0xff]
    %v1764 = vld [vmem:[%s4] sm:$0xf]
    %v1766 = vperm.slane %v1764, 0
    %v1767 = vperm.slane %v1764, 1
    %v1768 = vperm.slane %v1764, 2
    %v1769 = vperm.slane %v1764, 3
    %v1902 = vunpack.c.l.b16 %v1636
    %v1903 = vunpack.c.h.b16 %v1636
    %v1904 = vunpack.c.l.b16 %v1637
    %v1905 = vunpack.c.h.b16 %v1637
    %v1906 = vunpack.c.l.b16 %v1638
    %v1907 = vunpack.c.h.b16 %v1638
    %v1908 = vunpack.c.l.b16 %v1639
    %v1909 = vunpack.c.h.b16 %v1639
    %v1910 = vunpack.c.l.b16 %v1640
    %v1911 = vunpack.c.h.b16 %v1640
    %v1912 = vunpack.c.l.b16 %v1641
    %v1913 = vunpack.c.h.b16 %v1641
    %v1914 = vunpack.c.l.b16 %v1642
    %v1915 = vunpack.c.h.b16 %v1642
    %v1916 = vunpack.c.l.b16 %v1643
    %v1917 = vunpack.c.h.b16 %v1643
    %v1918 = vunpack.c.l.b16 %v1644
    %v1919 = vunpack.c.h.b16 %v1644
    %v1920 = vunpack.c.l.b16 %v1645
    %v1921 = vunpack.c.h.b16 %v1645
    %v1922 = vunpack.c.l.b16 %v1646
    %v1923 = vunpack.c.h.b16 %v1646
    %v1924 = vunpack.c.l.b16 %v1647
    %v1925 = vunpack.c.h.b16 %v1647
    %v1926 = vunpack.c.l.b16 %v1648
    %v1927 = vunpack.c.h.b16 %v1648
    %v1928 = vunpack.c.l.b16 %v1649
    %v1929 = vunpack.c.h.b16 %v1649
    %v1930 = vunpack.c.l.b16 %v1650
    %v1931 = vunpack.c.h.b16 %v1650
    %v1932 = vunpack.c.l.b16 %v1651
    %v1933 = vunpack.c.h.b16 %v1651
    %v1934 = vunpack.c.l.b16 %v1652
    %v1935 = vunpack.c.h.b16 %v1652
    %v1936 = vunpack.c.l.b16 %v1653
    %v1937 = vunpack.c.h.b16 %v1653
    %v1938 = vunpack.c.l.b16 %v1654
    %v1939 = vunpack.c.h.b16 %v1654
    %v1940 = vunpack.c.l.b16 %v1655
    %v1941 = vunpack.c.h.b16 %v1655
    %v1942 = vunpack.c.l.b16 %v1656
    %v1943 = vunpack.c.h.b16 %v1656
    %v1944 = vunpack.c.l.b16 %v1657
    %v1945 = vunpack.c.h.b16 %v1657
    %v1946 = vunpack.c.l.b16 %v1658
    %v1947 = vunpack.c.h.b16 %v1658
    %v1948 = vunpack.c.l.b16 %v1659
    %v1949 = vunpack.c.h.b16 %v1659
    %v1950 = vunpack.c.l.b16 %v1660
    %v1951 = vunpack.c.h.b16 %v1660
    %v1952 = vunpack.c.l.b16 %v1661
    %v1953 = vunpack.c.h.b16 %v1661
    %v1954 = vunpack.c.l.b16 %v1662
    %v1955 = vunpack.c.h.b16 %v1662
    %v1956 = vunpack.c.l.b16 %v1663
    %v1957 = vunpack.c.h.b16 %v1663
    %v1958 = vunpack.c.l.b16 %v1664
    %v1959 = vunpack.c.h.b16 %v1664
    %v1960 = vunpack.c.l.b16 %v1665
    %v1961 = vunpack.c.h.b16 %v1665
    %v1962 = vunpack.c.l.b16 %v1666
    %v1963 = vunpack.c.h.b16 %v1666
    %v1964 = vunpack.c.l.b16 %v1667
    %v1965 = vunpack.c.h.b16 %v1667
    %v1966 = vunpack.c.l.b16 %v1668
    %v1967 = vunpack.c.h.b16 %v1668
    %v1968 = vunpack.c.l.b16 %v1669
    %v1969 = vunpack.c.h.b16 %v1669
    %v1970 = vunpack.c.l.b16 %v1670
    %v1971 = vunpack.c.h.b16 %v1670
    %v1972 = vunpack.c.l.b16 %v1671
    %v1973 = vunpack.c.h.b16 %v1671
    %v1974 = vunpack.c.l.b16 %v1672
    %v1975 = vunpack.c.h.b16 %v1672
    %v1976 = vunpack.c.l.b16 %v1673
    %v1977 = vunpack.c.h.b16 %v1673
    %v1978 = vunpack.c.l.b16 %v1674
    %v1979 = vunpack.c.h.b16 %v1674
    %v1980 = vunpack.c.l.b16 %v1675
    %v1981 = vunpack.c.h.b16 %v1675
    %v1982 = vunpack.c.l.b16 %v1676
    %v1983 = vunpack.c.h.b16 %v1676
    %v1984 = vunpack.c.l.b16 %v1677
    %v1985 = vunpack.c.h.b16 %v1677
    %v1986 = vunpack.c.l.b16 %v1678
    %v1987 = vunpack.c.h.b16 %v1678
    %v1988 = vunpack.c.l.b16 %v1679
    %v1989 = vunpack.c.h.b16 %v1679
    %v1990 = vunpack.c.l.b16 %v1680
    %v1991 = vunpack.c.h.b16 %v1680
    %v1992 = vunpack.c.l.b16 %v1681
    %v1993 = vunpack.c.h.b16 %v1681
    %v1994 = vunpack.c.l.b16 %v1682
    %v1995 = vunpack.c.h.b16 %v1682
    %v1996 = vunpack.c.l.b16 %v1683
    %v1997 = vunpack.c.h.b16 %v1683
    %v1998 = vunpack.c.l.b16 %v1684
    %v1999 = vunpack.c.h.b16 %v1684
    %v2000 = vunpack.c.l.b16 %v1685
    %v2001 = vunpack.c.h.b16 %v1685
    %v2002 = vunpack.c.l.b16 %v1686
    %v2003 = vunpack.c.h.b16 %v1686
    %v2004 = vunpack.c.l.b16 %v1687
    %v2005 = vunpack.c.h.b16 %v1687
    %v2006 = vunpack.c.l.b16 %v1688
    %v2007 = vunpack.c.h.b16 %v1688
    %v2008 = vunpack.c.l.b16 %v1689
    %v2009 = vunpack.c.h.b16 %v1689
    %v2010 = vunpack.c.l.b16 %v1690
    %v2011 = vunpack.c.h.b16 %v1690
    %v2012 = vunpack.c.l.b16 %v1691
    %v2013 = vunpack.c.h.b16 %v1691
    %v2014 = vunpack.c.l.b16 %v1692
    %v2015 = vunpack.c.h.b16 %v1692
    %v2016 = vunpack.c.l.b16 %v1693
    %v2017 = vunpack.c.h.b16 %v1693
    %v2018 = vunpack.c.l.b16 %v1694
    %v2019 = vunpack.c.h.b16 %v1694
    %v2020 = vunpack.c.l.b16 %v1695
    %v2021 = vunpack.c.h.b16 %v1695
    %v2022 = vunpack.c.l.b16 %v1696
    %v2023 = vunpack.c.h.b16 %v1696
    %v2024 = vunpack.c.l.b16 %v1697
    %v2025 = vunpack.c.h.b16 %v1697
    %v2026 = vunpack.c.l.b16 %v1698
    %v2027 = vunpack.c.h.b16 %v1698
    %v2028 = vunpack.c.l.b16 %v1699
    %v2029 = vunpack.c.h.b16 %v1699
    %v2030 = vunpack.c.l.b16 %v1700
    %v2031 = vunpack.c.h.b16 %v1700
    %v2032 = vunpack.c.l.b16 %v1701
    %v2033 = vunpack.c.h.b16 %v1701
    %v2034 = vunpack.c.l.b16 %v1702
    %v2035 = vunpack.c.h.b16 %v1702
    %v2036 = vunpack.c.l.b16 %v1703
    %v2037 = vunpack.c.h.b16 %v1703
    %v2038 = vunpack.c.l.b16 %v1704
    %v2039 = vunpack.c.h.b16 %v1704
    %v2040 = vunpack.c.l.b16 %v1705
    %v2041 = vunpack.c.h.b16 %v1705
    %v2042 = vunpack.c.l.b16 %v1706
    %v2043 = vunpack.c.h.b16 %v1706
    %v2044 = vunpack.c.l.b16 %v1707
    %v2045 = vunpack.c.h.b16 %v1707
    %v2046 = vunpack.c.l.b16 %v1708
    %v2047 = vunpack.c.h.b16 %v1708
    %v2048 = vunpack.c.l.b16 %v1709
    %v2049 = vunpack.c.h.b16 %v1709
    %v2050 = vunpack.c.l.b16 %v1710
    %v2051 = vunpack.c.h.b16 %v1710
    %v2052 = vunpack.c.l.b16 %v1711
    %v2053 = vunpack.c.h.b16 %v1711
    %v2054 = vunpack.c.l.b16 %v1712
    %v2055 = vunpack.c.h.b16 %v1712
    %v2056 = vunpack.c.l.b16 %v1713
    %v2057 = vunpack.c.h.b16 %v1713
    %v2058 = vunpack.c.l.b16 %v1714
    %v2059 = vunpack.c.h.b16 %v1714
    %v2060 = vunpack.c.l.b16 %v1715
    %v2061 = vunpack.c.h.b16 %v1715
    %v2062 = vunpack.c.l.b16 %v1716
    %v2063 = vunpack.c.h.b16 %v1716
    %v2064 = vunpack.c.l.b16 %v1717
    %v2065 = vunpack.c.h.b16 %v1717
    %v2066 = vunpack.c.l.b16 %v1718
    %v2067 = vunpack.c.h.b16 %v1718
    %v2068 = vunpack.c.l.b16 %v1719
    %v2069 = vunpack.c.h.b16 %v1719
    %v2070 = vunpack.c.l.b16 %v1720
    %v2071 = vunpack.c.h.b16 %v1720
    %v2072 = vunpack.c.l.b16 %v1721
    %v2073 = vunpack.c.h.b16 %v1721
    %v2074 = vunpack.c.l.b16 %v1722
    %v2075 = vunpack.c.h.b16 %v1722
    %v2076 = vunpack.c.l.b16 %v1723
    %v2077 = vunpack.c.h.b16 %v1723
    %v2078 = vunpack.c.l.b16 %v1724
    %v2079 = vunpack.c.h.b16 %v1724
    %v2080 = vunpack.c.l.b16 %v1725
    %v2081 = vunpack.c.h.b16 %v1725
    %v2082 = vunpack.c.l.b16 %v1726
    %v2083 = vunpack.c.h.b16 %v1726
    %v2084 = vunpack.c.l.b16 %v1727
    %v2085 = vunpack.c.h.b16 %v1727
    %v2086 = vunpack.c.l.b16 %v1728
    %v2087 = vunpack.c.h.b16 %v1728
    %v2088 = vunpack.c.l.b16 %v1729
    %v2089 = vunpack.c.h.b16 %v1729
    %v2090 = vunpack.c.l.b16 %v1730
    %v2091 = vunpack.c.h.b16 %v1730
    %v2092 = vunpack.c.l.b16 %v1731
    %v2093 = vunpack.c.h.b16 %v1731
    %v2094 = vunpack.c.l.b16 %v1732
    %v2095 = vunpack.c.h.b16 %v1732
    %v2096 = vunpack.c.l.b16 %v1733
    %v2097 = vunpack.c.h.b16 %v1733
    %v2098 = vunpack.c.l.b16 %v1734
    %v2099 = vunpack.c.h.b16 %v1734
    %v2100 = vunpack.c.l.b16 %v1735
    %v2101 = vunpack.c.h.b16 %v1735
    %v2102 = vunpack.c.l.b16 %v1736
    %v2103 = vunpack.c.h.b16 %v1736
    %v2104 = vunpack.c.l.b16 %v1737
    %v2105 = vunpack.c.h.b16 %v1737
    %v2106 = vunpack.c.l.b16 %v1738
    %v2107 = vunpack.c.h.b16 %v1738
    %v2108 = vunpack.c.l.b16 %v1739
    %v2109 = vunpack.c.h.b16 %v1739
    %v2110 = vunpack.c.l.b16 %v1740
    %v2111 = vunpack.c.h.b16 %v1740
    %v2112 = vunpack.c.l.b16 %v1741
    %v2113 = vunpack.c.h.b16 %v1741
    %v2114 = vunpack.c.l.b16 %v1742
    %v2115 = vunpack.c.h.b16 %v1742
    %v2116 = vunpack.c.l.b16 %v1743
    %v2117 = vunpack.c.h.b16 %v1743
    %v2118 = vunpack.c.l.b16 %v1744
    %v2119 = vunpack.c.h.b16 %v1744
    %v2120 = vunpack.c.l.b16 %v1745
    %v2121 = vunpack.c.h.b16 %v1745
    %v2122 = vunpack.c.l.b16 %v1746
    %v2123 = vunpack.c.h.b16 %v1746
    %v2124 = vunpack.c.l.b16 %v1747
    %v2125 = vunpack.c.h.b16 %v1747
    %v2126 = vunpack.c.l.b16 %v1748
    %v2127 = vunpack.c.h.b16 %v1748
    %v2128 = vunpack.c.l.b16 %v1749
    %v2129 = vunpack.c.h.b16 %v1749
    %v2130 = vunpack.c.l.b16 %v1750
    %v2131 = vunpack.c.h.b16 %v1750
    %v2132 = vunpack.c.l.b16 %v1751
    %v2133 = vunpack.c.h.b16 %v1751
    %v2134 = vunpack.c.l.b16 %v1752
    %v2135 = vunpack.c.h.b16 %v1752
    %v2136 = vunpack.c.l.b16 %v1753
    %v2137 = vunpack.c.h.b16 %v1753
    %v2138 = vunpack.c.l.b16 %v1754
    %v2139 = vunpack.c.h.b16 %v1754
    %v2140 = vunpack.c.l.b16 %v1755
    %v2141 = vunpack.c.h.b16 %v1755
    %v2142 = vunpack.c.l.b16 %v1756
    %v2143 = vunpack.c.h.b16 %v1756
    %v2144 = vunpack.c.l.b16 %v1757
    %v2145 = vunpack.c.h.b16 %v1757
    %v2146 = vunpack.c.l.b16 %v1758
    %v2147 = vunpack.c.h.b16 %v1758
    %v2148 = vunpack.c.l.b16 %v1759
    %v2149 = vunpack.c.h.b16 %v1759
    %v2150 = vunpack.c.l.b16 %v1760
    %v2151 = vunpack.c.h.b16 %v1760
    %v2152 = vunpack.c.l.b16 %v1761
    %v2153 = vunpack.c.h.b16 %v1761
    %v2154 = vunpack.c.l.b16 %v1762
    %v2155 = vunpack.c.h.b16 %v1762
    %v2156 = vunpack.c.l.b16 %v1763
    %v2157 = vunpack.c.h.b16 %v1763
    %v2158 = vpack.c.b16 %v1906, %v1902
    %v2159 = vpack.c.b16 %v1907, %v1903
    %v2160 = vpack.c.b16 %v1908, %v1904
    %v2161 = vpack.c.b16 %v1909, %v1905
    %v2162 = vpack.c.b16 %v1914, %v1910
    %v2163 = vpack.c.b16 %v1915, %v1911
    %v2164 = vpack.c.b16 %v1916, %v1912
    %v2165 = vpack.c.b16 %v1917, %v1913
    %v2166 = vpack.c.b16 %v1922, %v1918
    %v2167 = vpack.c.b16 %v1923, %v1919
    %v2168 = vpack.c.b16 %v1924, %v1920
    %v2169 = vpack.c.b16 %v1925, %v1921
    %v2170 = vpack.c.b16 %v1930, %v1926
    %v2171 = vpack.c.b16 %v1931, %v1927
    %v2172 = vpack.c.b16 %v1932, %v1928
    %v2173 = vpack.c.b16 %v1933, %v1929
    %v2174 = vpack.c.b16 %v1938, %v1934
    %v2175 = vpack.c.b16 %v1939, %v1935
    %v2176 = vpack.c.b16 %v1940, %v1936
    %v2177 = vpack.c.b16 %v1941, %v1937
    %v2178 = vpack.c.b16 %v1946, %v1942
    %v2179 = vpack.c.b16 %v1947, %v1943
    %v2180 = vpack.c.b16 %v1948, %v1944
    %v2181 = vpack.c.b16 %v1949, %v1945
    %v2182 = vpack.c.b16 %v1954, %v1950
    %v2183 = vpack.c.b16 %v1955, %v1951
    %v2184 = vpack.c.b16 %v1956, %v1952
    %v2185 = vpack.c.b16 %v1957, %v1953
    %v2186 = vpack.c.b16 %v1962, %v1958
    %v2187 = vpack.c.b16 %v1963, %v1959
    %v2188 = vpack.c.b16 %v1964, %v1960
    %v2189 = vpack.c.b16 %v1965, %v1961
    %v2190 = vpack.c.b16 %v1970, %v1966
    %v2191 = vpack.c.b16 %v1971, %v1967
    %v2192 = vpack.c.b16 %v1972, %v1968
    %v2193 = vpack.c.b16 %v1973, %v1969
    %v2194 = vpack.c.b16 %v1978, %v1974
    %v2195 = vpack.c.b16 %v1979, %v1975
    %v2196 = vpack.c.b16 %v1980, %v1976
    %v2197 = vpack.c.b16 %v1981, %v1977
    %v2198 = vpack.c.b16 %v1986, %v1982
    %v2199 = vpack.c.b16 %v1987, %v1983
    %v2200 = vpack.c.b16 %v1988, %v1984
    %v2201 = vpack.c.b16 %v1989, %v1985
    %v2202 = vpack.c.b16 %v1994, %v1990
    %v2203 = vpack.c.b16 %v1995, %v1991
    %v2204 = vpack.c.b16 %v1996, %v1992
    %v2205 = vpack.c.b16 %v1997, %v1993
    %v2206 = vpack.c.b16 %v2002, %v1998
    %v2207 = vpack.c.b16 %v2003, %v1999
    %v2208 = vpack.c.b16 %v2004, %v2000
    %v2209 = vpack.c.b16 %v2005, %v2001
    %v2210 = vpack.c.b16 %v2010, %v2006
    %v2211 = vpack.c.b16 %v2011, %v2007
    %v2212 = vpack.c.b16 %v2012, %v2008
    %v2213 = vpack.c.b16 %v2013, %v2009
    %v2214 = vpack.c.b16 %v2018, %v2014
    %v2215 = vpack.c.b16 %v2019, %v2015
    %v2216 = vpack.c.b16 %v2020, %v2016
    %v2217 = vpack.c.b16 %v2021, %v2017
    %v2218 = vpack.c.b16 %v2026, %v2022
    %v2219 = vpack.c.b16 %v2027, %v2023
    %v2220 = vpack.c.b16 %v2028, %v2024
    %v2221 = vpack.c.b16 %v2029, %v2025
    %v2222 = vpack.c.b16 %v2034, %v2030
    %v2223 = vpack.c.b16 %v2035, %v2031
    %v2224 = vpack.c.b16 %v2036, %v2032
    %v2225 = vpack.c.b16 %v2037, %v2033
    %v2226 = vpack.c.b16 %v2042, %v2038
    %v2227 = vpack.c.b16 %v2043, %v2039
    %v2228 = vpack.c.b16 %v2044, %v2040
    %v2229 = vpack.c.b16 %v2045, %v2041
    %v2230 = vpack.c.b16 %v2050, %v2046
    %v2231 = vpack.c.b16 %v2051, %v2047
    %v2232 = vpack.c.b16 %v2052, %v2048
    %v2233 = vpack.c.b16 %v2053, %v2049
    %v2234 = vpack.c.b16 %v2058, %v2054
    %v2235 = vpack.c.b16 %v2059, %v2055
    %v2236 = vpack.c.b16 %v2060, %v2056
    %v2237 = vpack.c.b16 %v2061, %v2057
    %v2238 = vpack.c.b16 %v2066, %v2062
    %v2239 = vpack.c.b16 %v2067, %v2063
    %v2240 = vpack.c.b16 %v2068, %v2064
    %v2241 = vpack.c.b16 %v2069, %v2065
    %v2242 = vpack.c.b16 %v2074, %v2070
    %v2243 = vpack.c.b16 %v2075, %v2071
    %v2244 = vpack.c.b16 %v2076, %v2072
    %v2245 = vpack.c.b16 %v2077, %v2073
    %v2246 = vpack.c.b16 %v2082, %v2078
    %v2247 = vpack.c.b16 %v2083, %v2079
    %v2248 = vpack.c.b16 %v2084, %v2080
    %v2249 = vpack.c.b16 %v2085, %v2081
    %v2250 = vpack.c.b16 %v2090, %v2086
    %v2251 = vpack.c.b16 %v2091, %v2087
    %v2252 = vpack.c.b16 %v2092, %v2088
    %v2253 = vpack.c.b16 %v2093, %v2089
    %v2254 = vpack.c.b16 %v2098, %v2094
    %v2255 = vpack.c.b16 %v2099, %v2095
    %v2256 = vpack.c.b16 %v2100, %v2096
    %v2257 = vpack.c.b16 %v2101, %v2097
    %v2258 = vpack.c.b16 %v2106, %v2102
    %v2259 = vpack.c.b16 %v2107, %v2103
    %v2260 = vpack.c.b16 %v2108, %v2104
    %v2261 = vpack.c.b16 %v2109, %v2105
    %v2262 = vpack.c.b16 %v2114, %v2110
    %v2263 = vpack.c.b16 %v2115, %v2111
    %v2264 = vpack.c.b16 %v2116, %v2112
    %v2265 = vpack.c.b16 %v2117, %v2113
    %v2266 = vpack.c.b16 %v2122, %v2118
    %v2267 = vpack.c.b16 %v2123, %v2119
    %v2268 = vpack.c.b16 %v2124, %v2120
    %v2269 = vpack.c.b16 %v2125, %v2121
    %v2270 = vpack.c.b16 %v2130, %v2126
    %v2271 = vpack.c.b16 %v2131, %v2127
    %v2272 = vpack.c.b16 %v2132, %v2128
    %v2273 = vpack.c.b16 %v2133, %v2129
    %v2274 = vpack.c.b16 %v2138, %v2134
    %v2275 = vpack.c.b16 %v2139, %v2135
    %v2276 = vpack.c.b16 %v2140, %v2136
    %v2277 = vpack.c.b16 %v2141, %v2137
    %v2278 = vpack.c.b16 %v2146, %v2142
    %v2279 = vpack.c.b16 %v2147, %v2143
    %v2280 = vpack.c.b16 %v2148, %v2144
    %v2281 = vpack.c.b16 %v2149, %v2145
    %v2282 = vpack.c.b16 %v2154, %v2150
    %v2283 = vpack.c.b16 %v2155, %v2151
    %v2284 = vpack.c.b16 %v2156, %v2152
    %v2285 = vpack.c.b16 %v2157, %v2153
    %2414 = vmatpush.bf16.msra.mxu0 %v2186
    %2415 = vmatpush.bf16.msra.mxu0 %v2182
    %2416 = vmatpush.bf16.msra.mxu0 %v2178
    %2417 = vmatpush.bf16.msra.mxu0 %v2174
    %2418 = vmatpush.bf16.msra.mxu0 %v2170
    %2419 = vmatpush.bf16.msra.mxu0 %v2166
    %2420 = vmatpush.bf16.msra.mxu0 %v2162
    %2421 = vmatpush.bf16.msra.mxu0 %v2158
    %2422 = vmatmul.bf16.gmra.mxu0 %v1632
    %v2423 = vpop.f32.mrf.mxu0
    %v2424 = vadd.f32 %v1766, %v2423
    %v2425 = vpop.f32.mrf.mxu0
    %2426 = vdwg.mxu0
    %2427 = vmatpush.bf16.msra.mxu0 %v2218
    %2428 = vmatpush.bf16.msra.mxu0 %v2214
    %2429 = vmatpush.bf16.msra.mxu0 %v2210
    %2430 = vmatpush.bf16.msra.mxu0 %v2206
    %2431 = vmatpush.bf16.msra.mxu0 %v2202
    %2432 = vmatpush.bf16.msra.mxu0 %v2198
    %2433 = vmatpush.bf16.msra.mxu0 %v2194
    %2434 = vmatpush.bf16.msra.mxu0 %v2190
    %2435 = vmatmul.bf16.gmra.mxu0 %v1633
    %v2436 = vpop.f32.mrf.mxu0
    %v2437 = vadd.f32 %v2424, %v2436
    %v2438 = vpop.f32.mrf.mxu0
    %2439 = vdwg.mxu0
    %2440 = vmatpush.bf16.msra.mxu0 %v2250
    %2441 = vmatpush.bf16.msra.mxu0 %v2246
    %2442 = vmatpush.bf16.msra.mxu0 %v2242
    %2443 = vmatpush.bf16.msra.mxu0 %v2238
    %2444 = vmatpush.bf16.msra.mxu0 %v2234
    %2445 = vmatpush.bf16.msra.mxu0 %v2230
    %2446 = vmatpush.bf16.msra.mxu0 %v2226
    %2447 = vmatpush.bf16.msra.mxu0 %v2222
    %2448 = vmatmul.bf16.gmra.mxu0 %v1634
    %v2449 = vpop.f32.mrf.mxu0
    %v2450 = vadd.f32 %v2437, %v2449
    %v2451 = vpop.f32.mrf.mxu0
    %2452 = vdwg.mxu0
    %2453 = vmatpush.bf16.msra.mxu0 %v2282
    %2454 = vmatpush.bf16.msra.mxu0 %v2278
    %2455 = vmatpush.bf16.msra.mxu0 %v2274
    %2456 = vmatpush.bf16.msra.mxu0 %v2270
    %2457 = vmatpush.bf16.msra.mxu0 %v2266
    %2458 = vmatpush.bf16.msra.mxu0 %v2262
    %2459 = vmatpush.bf16.msra.mxu0 %v2258
    %2460 = vmatpush.bf16.msra.mxu0 %v2254
    %2461 = vmatmul.bf16.gmra.mxu0 %v1635
    %v2462 = vpop.f32.mrf.mxu0
    %v2463 = vadd.f32 %v2450, %v2462
    %v2464 = vpop.f32.mrf.mxu0
    %2465 = vdwg.mxu0
    %2466 = vmatpush.bf16.msra.mxu0 %v2187
    %2467 = vmatpush.bf16.msra.mxu0 %v2183
    %2468 = vmatpush.bf16.msra.mxu0 %v2179
    %2469 = vmatpush.bf16.msra.mxu0 %v2175
    %2470 = vmatpush.bf16.msra.mxu0 %v2171
    %2471 = vmatpush.bf16.msra.mxu0 %v2167
    %2472 = vmatpush.bf16.msra.mxu0 %v2163
    %2473 = vmatpush.bf16.msra.mxu0 %v2159
    %2474 = vmatmul.bf16.gmra.mxu0 %v1632
    %v2475 = vpop.f32.mrf.mxu0
    %v2476 = vadd.f32 %v1767, %v2475
    %v2477 = vpop.f32.mrf.mxu0
    %2478 = vdwg.mxu0
    %2479 = vmatpush.bf16.msra.mxu0 %v2219
    %2480 = vmatpush.bf16.msra.mxu0 %v2215
    %2481 = vmatpush.bf16.msra.mxu0 %v2211
    %2482 = vmatpush.bf16.msra.mxu0 %v2207
    %2483 = vmatpush.bf16.msra.mxu0 %v2203
    %2484 = vmatpush.bf16.msra.mxu0 %v2199
    %2485 = vmatpush.bf16.msra.mxu0 %v2195
    %2486 = vmatpush.bf16.msra.mxu0 %v2191
    %2487 = vmatmul.bf16.gmra.mxu0 %v1633
    %v2488 = vpop.f32.mrf.mxu0
    %v2489 = vadd.f32 %v2476, %v2488
    %v2490 = vpop.f32.mrf.mxu0
    %2491 = vdwg.mxu0
    %2492 = vmatpush.bf16.msra.mxu0 %v2251
    %2493 = vmatpush.bf16.msra.mxu0 %v2247
    %2494 = vmatpush.bf16.msra.mxu0 %v2243
    %2495 = vmatpush.bf16.msra.mxu0 %v2239
    %2496 = vmatpush.bf16.msra.mxu0 %v2235
    %2497 = vmatpush.bf16.msra.mxu0 %v2231
    %2498 = vmatpush.bf16.msra.mxu0 %v2227
    %2499 = vmatpush.bf16.msra.mxu0 %v2223
    %2500 = vmatmul.bf16.gmra.mxu0 %v1634
    %v2501 = vpop.f32.mrf.mxu0
    %v2502 = vadd.f32 %v2489, %v2501
    %v2503 = vpop.f32.mrf.mxu0
    %2504 = vdwg.mxu0
    %2505 = vmatpush.bf16.msra.mxu0 %v2283
    %2506 = vmatpush.bf16.msra.mxu0 %v2279
    %2507 = vmatpush.bf16.msra.mxu0 %v2275
    %2508 = vmatpush.bf16.msra.mxu0 %v2271
    %2509 = vmatpush.bf16.msra.mxu0 %v2267
    %2510 = vmatpush.bf16.msra.mxu0 %v2263
    %2511 = vmatpush.bf16.msra.mxu0 %v2259
    %2512 = vmatpush.bf16.msra.mxu0 %v2255
    %2513 = vmatmul.bf16.gmra.mxu0 %v1635
    %v2514 = vpop.f32.mrf.mxu0
    %v2515 = vadd.f32 %v2502, %v2514
    %v2516 = vpop.f32.mrf.mxu0
    %2517 = vdwg.mxu0
    %2518 = vmatpush.bf16.msra.mxu0 %v2188
    %2519 = vmatpush.bf16.msra.mxu0 %v2184
    %2520 = vmatpush.bf16.msra.mxu0 %v2180
    %2521 = vmatpush.bf16.msra.mxu0 %v2176
    %2522 = vmatpush.bf16.msra.mxu0 %v2172
    %2523 = vmatpush.bf16.msra.mxu0 %v2168
    %2524 = vmatpush.bf16.msra.mxu0 %v2164
    %2525 = vmatpush.bf16.msra.mxu0 %v2160
    %2526 = vmatmul.bf16.gmra.mxu0 %v1632
    %v2527 = vpop.f32.mrf.mxu0
    %v2528 = vadd.f32 %v1768, %v2527
    %v2529 = vpop.f32.mrf.mxu0
    %2530 = vdwg.mxu0
    %2531 = vmatpush.bf16.msra.mxu0 %v2220
    %2532 = vmatpush.bf16.msra.mxu0 %v2216
    %2533 = vmatpush.bf16.msra.mxu0 %v2212
    %2534 = vmatpush.bf16.msra.mxu0 %v2208
    %2535 = vmatpush.bf16.msra.mxu0 %v2204
    %2536 = vmatpush.bf16.msra.mxu0 %v2200
    %2537 = vmatpush.bf16.msra.mxu0 %v2196
    %2538 = vmatpush.bf16.msra.mxu0 %v2192
    %2539 = vmatmul.bf16.gmra.mxu0 %v1633
    %v2540 = vpop.f32.mrf.mxu0
    %v2541 = vadd.f32 %v2528, %v2540
    %v2542 = vpop.f32.mrf.mxu0
    %2543 = vdwg.mxu0
    %2544 = vmatpush.bf16.msra.mxu0 %v2252
    %2545 = vmatpush.bf16.msra.mxu0 %v2248
    %2546 = vmatpush.bf16.msra.mxu0 %v2244
    %2547 = vmatpush.bf16.msra.mxu0 %v2240
    %2548 = vmatpush.bf16.msra.mxu0 %v2236
    %2549 = vmatpush.bf16.msra.mxu0 %v2232
    %2550 = vmatpush.bf16.msra.mxu0 %v2228
    %2551 = vmatpush.bf16.msra.mxu0 %v2224
    %2552 = vmatmul.bf16.gmra.mxu0 %v1634
    %v2553 = vpop.f32.mrf.mxu0
    %v2554 = vadd.f32 %v2541, %v2553
    %v2555 = vpop.f32.mrf.mxu0
    %2556 = vdwg.mxu0
    %2557 = vmatpush.bf16.msra.mxu0 %v2284
    %2558 = vmatpush.bf16.msra.mxu0 %v2280
    %2559 = vmatpush.bf16.msra.mxu0 %v2276
    %2560 = vmatpush.bf16.msra.mxu0 %v2272
    %2561 = vmatpush.bf16.msra.mxu0 %v2268
    %2562 = vmatpush.bf16.msra.mxu0 %v2264
    %2563 = vmatpush.bf16.msra.mxu0 %v2260
    %2564 = vmatpush.bf16.msra.mxu0 %v2256
    %2565 = vmatmul.bf16.gmra.mxu0 %v1635
    %v2566 = vpop.f32.mrf.mxu0
    %v2567 = vadd.f32 %v2554, %v2566
    %v2568 = vpop.f32.mrf.mxu0
    %2569 = vdwg.mxu0
    %2570 = vmatpush.bf16.msra.mxu0 %v2189
    %2571 = vmatpush.bf16.msra.mxu0 %v2185
    %2572 = vmatpush.bf16.msra.mxu0 %v2181
    %2573 = vmatpush.bf16.msra.mxu0 %v2177
    %2574 = vmatpush.bf16.msra.mxu0 %v2173
    %2575 = vmatpush.bf16.msra.mxu0 %v2169
    %2576 = vmatpush.bf16.msra.mxu0 %v2165
    %2577 = vmatpush.bf16.msra.mxu0 %v2161
    %2578 = vmatmul.bf16.gmra.mxu0 %v1632
    %v2579 = vpop.f32.mrf.mxu0
    %v2580 = vadd.f32 %v1769, %v2579
    %v2581 = vpop.f32.mrf.mxu0
    %2582 = vdwg.mxu0
    %2583 = vmatpush.bf16.msra.mxu0 %v2221
    %2584 = vmatpush.bf16.msra.mxu0 %v2217
    %2585 = vmatpush.bf16.msra.mxu0 %v2213
    %2586 = vmatpush.bf16.msra.mxu0 %v2209
    %2587 = vmatpush.bf16.msra.mxu0 %v2205
    %2588 = vmatpush.bf16.msra.mxu0 %v2201
    %2589 = vmatpush.bf16.msra.mxu0 %v2197
    %2590 = vmatpush.bf16.msra.mxu0 %v2193
    %2591 = vmatmul.bf16.gmra.mxu0 %v1633
    %v2592 = vpop.f32.mrf.mxu0
    %v2593 = vadd.f32 %v2580, %v2592
    %v2594 = vpop.f32.mrf.mxu0
    %2595 = vdwg.mxu0
    %2596 = vmatpush.bf16.msra.mxu0 %v2253
    %2597 = vmatpush.bf16.msra.mxu0 %v2249
    %2598 = vmatpush.bf16.msra.mxu0 %v2245
    %2599 = vmatpush.bf16.msra.mxu0 %v2241
    %2600 = vmatpush.bf16.msra.mxu0 %v2237
    %2601 = vmatpush.bf16.msra.mxu0 %v2233
    %2602 = vmatpush.bf16.msra.mxu0 %v2229
    %2603 = vmatpush.bf16.msra.mxu0 %v2225
    %2604 = vmatmul.bf16.gmra.mxu0 %v1634
    %v2605 = vpop.f32.mrf.mxu0
    %v2606 = vadd.f32 %v2593, %v2605
    %v2607 = vpop.f32.mrf.mxu0
    %2608 = vdwg.mxu0
    %2609 = vmatpush.bf16.msra.mxu0 %v2285
    %2610 = vmatpush.bf16.msra.mxu0 %v2281
    %2611 = vmatpush.bf16.msra.mxu0 %v2277
    %2612 = vmatpush.bf16.msra.mxu0 %v2273
    %2613 = vmatpush.bf16.msra.mxu0 %v2269
    %2614 = vmatpush.bf16.msra.mxu0 %v2265
    %2615 = vmatpush.bf16.msra.mxu0 %v2261
    %2616 = vmatpush.bf16.msra.mxu0 %v2257
    %2617 = vmatmul.bf16.gmra.mxu0 %v1635
    %v2618 = vpop.f32.mrf.mxu0
    %v2619 = vadd.f32 %v2606, %v2618
    %v2620 = vpop.f32.mrf.mxu0
    %2621 = vdwg.mxu0
    %v2622 = vmax.f32 %v2463, 0.0
    %v2623 = vmax.f32 %v2515, 0.0
    %v2624 = vmax.f32 %v2567, 0.0
    %v2625 = vmax.f32 %v2619, 0.0
    %v2626 = vpack.c.bf16 %v2622, %v2622
    %v2627 = vpack.c.bf16 %v2623, %v2623
    %v2628 = vpack.c.bf16 %v2624, %v2624
    %v2629 = vpack.c.bf16 %v2625, %v2625
    %v2630 = vld [vmem:[%s5] sm:$0xf]
    %v2631 = vld [vmem:[%s5 + $0x4] sm:$0xf]
    %v2632 = vld [vmem:[%s5 + $0x8] sm:$0xf]
    %v2633 = vld [vmem:[%s5 + $0xc] sm:$0xf]
    %v2634 = vld [vmem:[%s5 + $0x10] sm:$0xf]
    %v2635 = vld [vmem:[%s5 + $0x14] sm:$0xf]
    %v2636 = vld [vmem:[%s5 + $0x18] sm:$0xf]
    %v2637 = vld [vmem:[%s5 + $0x1c] sm:$0xf]
    %v2638 = vld [vmem:[%s5 + $0x20] sm:$0xf]
    %v2639 = vld [vmem:[%s5 + $0x24] sm:$0xf]
    %v2640 = vld [vmem:[%s5 + $0x28] sm:$0xf]
    %v2641 = vld [vmem:[%s5 + $0x2c] sm:$0xf]
    %v2642 = vld [vmem:[%s5 + $0x30] sm:$0xf]
    %v2643 = vld [vmem:[%s5 + $0x34] sm:$0xf]
    %v2644 = vld [vmem:[%s5 + $0x38] sm:$0xf]
    %v2645 = vld [vmem:[%s5 + $0x3c] sm:$0xf]
    %v2646 = vld [vmem:[%s5 + $0x40] sm:$0xf]
    %v2647 = vld [vmem:[%s5 + $0x44] sm:$0xf]
    %v2648 = vld [vmem:[%s5 + $0x48] sm:$0xf]
    %v2649 = vld [vmem:[%s5 + $0x4c] sm:$0xf]
    %v2650 = vld [vmem:[%s5 + $0x50] sm:$0xf]
    %v2651 = vld [vmem:[%s5 + $0x54] sm:$0xf]
    %v2652 = vld [vmem:[%s5 + $0x58] sm:$0xf]
    %v2653 = vld [vmem:[%s5 + $0x5c] sm:$0xf]
    %v2654 = vld [vmem:[%s5 + $0x60] sm:$0xf]
    %v2655 = vld [vmem:[%s5 + $0x64] sm:$0xf]
    %v2656 = vld [vmem:[%s5 + $0x68] sm:$0xf]
    %v2657 = vld [vmem:[%s5 + $0x6c] sm:$0xf]
    %v2658 = vld [vmem:[%s5 + $0x70] sm:$0xf]
    %v2659 = vld [vmem:[%s5 + $0x74] sm:$0xf]
    %v2660 = vld [vmem:[%s5 + $0x78] sm:$0xf]
    %v2661 = vld [vmem:[%s5 + $0x7c] sm:$0xf]
    %v2662 = vld [vmem:[%s5 + $0x80] sm:$0xf]
    %v2663 = vld [vmem:[%s5 + $0x84] sm:$0xf]
    %v2664 = vld [vmem:[%s5 + $0x88] sm:$0xf]
    %v2665 = vld [vmem:[%s5 + $0x8c] sm:$0xf]
    %v2666 = vld [vmem:[%s5 + $0x90] sm:$0xf]
    %v2667 = vld [vmem:[%s5 + $0x94] sm:$0xf]
    %v2668 = vld [vmem:[%s5 + $0x98] sm:$0xf]
    %v2669 = vld [vmem:[%s5 + $0x9c] sm:$0xf]
    %v2670 = vld [vmem:[%s5 + $0xa0] sm:$0xf]
    %v2671 = vld [vmem:[%s5 + $0xa4] sm:$0xf]
    %v2672 = vld [vmem:[%s5 + $0xa8] sm:$0xf]
    %v2673 = vld [vmem:[%s5 + $0xac] sm:$0xf]
    %v2674 = vld [vmem:[%s5 + $0xb0] sm:$0xf]
    %v2675 = vld [vmem:[%s5 + $0xb4] sm:$0xf]
    %v2676 = vld [vmem:[%s5 + $0xb8] sm:$0xf]
    %v2677 = vld [vmem:[%s5 + $0xbc] sm:$0xf]
    %v2678 = vld [vmem:[%s5 + $0xc0] sm:$0xf]
    %v2679 = vld [vmem:[%s5 + $0xc4] sm:$0xf]
    %v2680 = vld [vmem:[%s5 + $0xc8] sm:$0xf]
    %v2681 = vld [vmem:[%s5 + $0xcc] sm:$0xf]
    %v2682 = vld [vmem:[%s5 + $0xd0] sm:$0xf]
    %v2683 = vld [vmem:[%s5 + $0xd4] sm:$0xf]
    %v2684 = vld [vmem:[%s5 + $0xd8] sm:$0xf]
    %v2685 = vld [vmem:[%s5 + $0xdc] sm:$0xf]
    %v2686 = vld [vmem:[%s5 + $0xe0] sm:$0xf]
    %v2687 = vld [vmem:[%s5 + $0xe4] sm:$0xf]
    %v2688 = vld [vmem:[%s5 + $0xe8] sm:$0xf]
    %v2689 = vld [vmem:[%s5 + $0xec] sm:$0xf]
    %v2690 = vld [vmem:[%s5 + $0xf0] sm:$0xf]
    %v2691 = vld [vmem:[%s5 + $0xf4] sm:$0xf]
    %v2692 = vld [vmem:[%s5 + $0xf8] sm:$0xf]
    %v2693 = vld [vmem:[%s5 + $0xfc] sm:$0xf]
    %v2694 = vld [vmem:[%s6] sm:$0x1]
    %v2696 = vperm.slane %v2694, 0
    %v2762 = vunpack.c.l.b16 %v2630
    %v2763 = vunpack.c.l.b16 %v2631
    %v2764 = vunpack.c.l.b16 %v2632
    %v2765 = vunpack.c.l.b16 %v2633
    %v2766 = vunpack.c.l.b16 %v2634
    %v2767 = vunpack.c.l.b16 %v2635
    %v2768 = vunpack.c.l.b16 %v2636
    %v2769 = vunpack.c.l.b16 %v2637
    %v2770 = vunpack.c.l.b16 %v2638
    %v2771 = vunpack.c.l.b16 %v2639
    %v2772 = vunpack.c.l.b16 %v2640
    %v2773 = vunpack.c.l.b16 %v2641
    %v2774 = vunpack.c.l.b16 %v2642
    %v2775 = vunpack.c.l.b16 %v2643
    %v2776 = vunpack.c.l.b16 %v2644
    %v2777 = vunpack.c.l.b16 %v2645
    %v2778 = vunpack.c.l.b16 %v2646
    %v2779 = vunpack.c.l.b16 %v2647
    %v2780 = vunpack.c.l.b16 %v2648
    %v2781 = vunpack.c.l.b16 %v2649
    %v2782 = vunpack.c.l.b16 %v2650
    %v2783 = vunpack.c.l.b16 %v2651
    %v2784 = vunpack.c.l.b16 %v2652
    %v2785 = vunpack.c.l.b16 %v2653
    %v2786 = vunpack.c.l.b16 %v2654
    %v2787 = vunpack.c.l.b16 %v2655
    %v2788 = vunpack.c.l.b16 %v2656
    %v2789 = vunpack.c.l.b16 %v2657
    %v2790 = vunpack.c.l.b16 %v2658
    %v2791 = vunpack.c.l.b16 %v2659
    %v2792 = vunpack.c.l.b16 %v2660
    %v2793 = vunpack.c.l.b16 %v2661
    %v2794 = vunpack.c.l.b16 %v2662
    %v2795 = vunpack.c.l.b16 %v2663
    %v2796 = vunpack.c.l.b16 %v2664
    %v2797 = vunpack.c.l.b16 %v2665
    %v2798 = vunpack.c.l.b16 %v2666
    %v2799 = vunpack.c.l.b16 %v2667
    %v2800 = vunpack.c.l.b16 %v2668
    %v2801 = vunpack.c.l.b16 %v2669
    %v2802 = vunpack.c.l.b16 %v2670
    %v2803 = vunpack.c.l.b16 %v2671
    %v2804 = vunpack.c.l.b16 %v2672
    %v2805 = vunpack.c.l.b16 %v2673
    %v2806 = vunpack.c.l.b16 %v2674
    %v2807 = vunpack.c.l.b16 %v2675
    %v2808 = vunpack.c.l.b16 %v2676
    %v2809 = vunpack.c.l.b16 %v2677
    %v2810 = vunpack.c.l.b16 %v2678
    %v2811 = vunpack.c.l.b16 %v2679
    %v2812 = vunpack.c.l.b16 %v2680
    %v2813 = vunpack.c.l.b16 %v2681
    %v2814 = vunpack.c.l.b16 %v2682
    %v2815 = vunpack.c.l.b16 %v2683
    %v2816 = vunpack.c.l.b16 %v2684
    %v2817 = vunpack.c.l.b16 %v2685
    %v2818 = vunpack.c.l.b16 %v2686
    %v2819 = vunpack.c.l.b16 %v2687
    %v2820 = vunpack.c.l.b16 %v2688
    %v2821 = vunpack.c.l.b16 %v2689
    %v2822 = vunpack.c.l.b16 %v2690
    %v2823 = vunpack.c.l.b16 %v2691
    %v2824 = vunpack.c.l.b16 %v2692
    %v2825 = vunpack.c.l.b16 %v2693
    %v2826 = vpack.c.b16 %v2763, %v2762
    %v2827 = vpack.c.b16 %v2765, %v2764
    %v2828 = vpack.c.b16 %v2767, %v2766
    %v2829 = vpack.c.b16 %v2769, %v2768
    %v2830 = vpack.c.b16 %v2771, %v2770
    %v2831 = vpack.c.b16 %v2773, %v2772
    %v2832 = vpack.c.b16 %v2775, %v2774
    %v2833 = vpack.c.b16 %v2777, %v2776
    %v2834 = vpack.c.b16 %v2779, %v2778
    %v2835 = vpack.c.b16 %v2781, %v2780
    %v2836 = vpack.c.b16 %v2783, %v2782
    %v2837 = vpack.c.b16 %v2785, %v2784
    %v2838 = vpack.c.b16 %v2787, %v2786
    %v2839 = vpack.c.b16 %v2789, %v2788
    %v2840 = vpack.c.b16 %v2791, %v2790
    %v2841 = vpack.c.b16 %v2793, %v2792
    %v2842 = vpack.c.b16 %v2795, %v2794
    %v2843 = vpack.c.b16 %v2797, %v2796
    %v2844 = vpack.c.b16 %v2799, %v2798
    %v2845 = vpack.c.b16 %v2801, %v2800
    %v2846 = vpack.c.b16 %v2803, %v2802
    %v2847 = vpack.c.b16 %v2805, %v2804
    %v2848 = vpack.c.b16 %v2807, %v2806
    %v2849 = vpack.c.b16 %v2809, %v2808
    %v2850 = vpack.c.b16 %v2811, %v2810
    %v2851 = vpack.c.b16 %v2813, %v2812
    %v2852 = vpack.c.b16 %v2815, %v2814
    %v2853 = vpack.c.b16 %v2817, %v2816
    %v2854 = vpack.c.b16 %v2819, %v2818
    %v2855 = vpack.c.b16 %v2821, %v2820
    %v2856 = vpack.c.b16 %v2823, %v2822
    %v2857 = vpack.c.b16 %v2825, %v2824
    %2890 = vmatpush.bf16.msra.mxu0 %v2833
    %2891 = vmatpush.bf16.msra.mxu0 %v2832
    %2892 = vmatpush.bf16.msra.mxu0 %v2831
    %2893 = vmatpush.bf16.msra.mxu0 %v2830
    %2894 = vmatpush.bf16.msra.mxu0 %v2829
    %2895 = vmatpush.bf16.msra.mxu0 %v2828
    %2896 = vmatpush.bf16.msra.mxu0 %v2827
    %2897 = vmatpush.bf16.msra.mxu0 %v2826
    %2898 = vmatmul.bf16.gmra.mxu0 %v2626
    %v2899 = vpop.f32.mrf.mxu0
    %v2900 = vadd.f32 %v2696, %v2899
    %v2901 = vpop.f32.mrf.mxu0
    %2902 = vdwg.mxu0
    %2903 = vmatpush.bf16.msra.mxu0 %v2841
    %2904 = vmatpush.bf16.msra.mxu0 %v2840
    %2905 = vmatpush.bf16.msra.mxu0 %v2839
    %2906 = vmatpush.bf16.msra.mxu0 %v2838
    %2907 = vmatpush.bf16.msra.mxu0 %v2837
    %2908 = vmatpush.bf16.msra.mxu0 %v2836
    %2909 = vmatpush.bf16.msra.mxu0 %v2835
    %2910 = vmatpush.bf16.msra.mxu0 %v2834
    %2911 = vmatmul.bf16.gmra.mxu0 %v2627
    %v2912 = vpop.f32.mrf.mxu0
    %v2913 = vadd.f32 %v2900, %v2912
    %v2914 = vpop.f32.mrf.mxu0
    %2915 = vdwg.mxu0
    %2916 = vmatpush.bf16.msra.mxu0 %v2849
    %2917 = vmatpush.bf16.msra.mxu0 %v2848
    %2918 = vmatpush.bf16.msra.mxu0 %v2847
    %2919 = vmatpush.bf16.msra.mxu0 %v2846
    %2920 = vmatpush.bf16.msra.mxu0 %v2845
    %2921 = vmatpush.bf16.msra.mxu0 %v2844
    %2922 = vmatpush.bf16.msra.mxu0 %v2843
    %2923 = vmatpush.bf16.msra.mxu0 %v2842
    %2924 = vmatmul.bf16.gmra.mxu0 %v2628
    %v2925 = vpop.f32.mrf.mxu0
    %v2926 = vadd.f32 %v2913, %v2925
    %v2927 = vpop.f32.mrf.mxu0
    %2928 = vdwg.mxu0
    %2929 = vmatpush.bf16.msra.mxu0 %v2857
    %2930 = vmatpush.bf16.msra.mxu0 %v2856
    %2931 = vmatpush.bf16.msra.mxu0 %v2855
    %2932 = vmatpush.bf16.msra.mxu0 %v2854
    %2933 = vmatpush.bf16.msra.mxu0 %v2853
    %2934 = vmatpush.bf16.msra.mxu0 %v2852
    %2935 = vmatpush.bf16.msra.mxu0 %v2851
    %2936 = vmatpush.bf16.msra.mxu0 %v2850
    %2937 = vmatmul.bf16.gmra.mxu0 %v2629
    %v2938 = vpop.f32.mrf.mxu0
    %v2939 = vadd.f32 %v2926, %v2938
    %v2940 = vpop.f32.mrf.mxu0
    %2941 = vdwg.mxu0
    %2942 = vst [vmem:[#allocation7] sm:$0xff] %v2939
    // Predicated region
    $region38: #{mlp_forward.1} parent=1 // pred_check
      _
    $region39: #{mlp_forward.1} parent=1 // pred_check_branch
      %2944 = sbr.rel (0) target = $region41
    $region40: #{mlp_forward.1} parent=1 // pred_region
      %2946 = vsyncadd [#allocation4], 0
      %s2948 = sshll.u32 [#allocation7], 4
      %s2949 = int_to_ptr.vmem [resolvable:$true] %s2948
      %s2950 = sshll.u32 %s7, 4
      %s2951 = int_to_ptr.hbm [resolvable:$true] %s2950
      %2953 = dma.vmem_to_hbm [thread:$0]  %s2949, 128, %s2951, [#allocation4]
    $region41: #{mlp_forward.1} parent=1 // pred_fallthru
      _
    // Predicated region
    $region42: #{mlp_forward.1} parent=1 // pred_check
      _
    $region43: #{mlp_forward.1} parent=1 // pred_check_branch
      %2955 = sbr.rel (0) target = $region45
    $region44: #{mlp_forward.1} parent=1 // pred_region
      %2957 = dma.done [#allocation4], 128
    $region45: #{mlp_forward.1} parent=1 // pred_fallthru
      _
    %2958 = vsyncpa [#allocation3], 1
    %2959 = vsyncpa [#allocation6], 1
    %2960 = vsyncpa [#allocation4], 1

</llo_original>
